<compile_context>
chip_gen: v7x
topology: tpu7x:2x2x1
jax: 0.10.0
libtpu: 0.0.40
codegen_flags: <defaults>
</compile_context>

<pallas_src>
import jax
import jax.numpy as jnp
from jax.experimental import pallas as pl
from jax.experimental.pallas import tpu as pltpu


def _phrase_head_kernel(x_ref, w_ref, out_ref):
    """Fused AvgPool2d((12,2)) + view(-1,1024) + Linear(1024,1152,bias=False).

    x_ref   : [TB, 24, 512] bf16  (lane-dense: channels in the 128-lane axis)
    w_ref   : [512, 1152]   bf16  (pitch+time halves of linear weight, fused & transposed)
    out_ref : [TB, 1152]    f32
    """
    x = x_ref[...].astype(jnp.float32)            # upcast for exact pooling
    pooled = jnp.mean(x, axis=1)                  # AvgPool2d((12,2)) -> [TB, 512], sublane reduce
    z = jnp.dot(pooled.astype(jnp.bfloat16), w_ref[...],
                preferred_element_type=jnp.float32)   # MXU, f32 accumulate
    out_ref[...] = z


def prepare_fused_weight(linear_w):
    """One-time (model-load) weight prep.

    cat((pitch, time), dim=1) @ W.T with pitch == time collapses to
    pooled @ (W[:, :512] + W[:, 512:]).T.  Only valid while the pitch/time
    branches are identical (identity submodules, see TODO below).
    """
    c_half = linear_w.shape[1] // 2               # 512
    w_fused = (linear_w[:, :c_half] + linear_w[:, c_half:]).T   # [512, 1152]
    return w_fused.astype(jnp.bfloat16)


def phrase_model_forward(phrase, w_fused_bf16, *, batch_tile=256):
    """Forward pass of PhraseModel.

    phrase        : [B, 512, 12, 2] f32 (NCHW)
    w_fused_bf16  : [512, 1152]     bf16 (from prepare_fused_weight)
    returns       : [B, 1152]       f32
    """
    # TODO(synk): TimePitchModule / PitchTimeModule definitions are not provided
    # in the source; treated as identity (pitch == time == phrase), which is what
    # makes the weight fusion above valid.
    # TODO(synk): ResidualModule / PoolingModule definitions are not provided;
    # self.layers is treated as empty (identity).
    B, C, H, W = phrase.shape                     # C=512, H=12, W=2
    HW = H * W                                    # 24
    OUT = w_fused_bf16.shape[1]                   # 1152

    # NCHW -> [B, H*W, C] lane-dense layout, bf16 activations (layout plumbing
    # done XLA-side, outside the kernel).
    x = phrase.reshape(B, C, HW).transpose(0, 2, 1).astype(jnp.bfloat16)

    tb = min(batch_tile, B)                       # tb == 256 (8-aligned) or == B (full dim)
    grid = (pl.cdiv(B, tb),)

    out = pl.pallas_call(
        _phrase_head_kernel,
        out_shape=jax.ShapeDtypeStruct((B, OUT), jnp.float32),
        grid_spec=pltpu.PrefetchScalarGridSpec(
            num_scalar_prefetch=0,
            grid=grid,
            in_specs=[
                # activation tiles stream through the batch grid
                pl.BlockSpec((tb, HW, C), lambda i: (i, 0, 0)),
                # fused weight: same block every step -> stays VMEM-resident
                pl.BlockSpec((C, OUT), lambda i: (0, 0)),
            ],
            out_specs=pl.BlockSpec((tb, OUT), lambda i: (i, 0)),
        ),
        compiler_params=pltpu.CompilerParams(
            dimension_semantics=("parallel",),    # megacore/2-TC sharding on v7x
            vmem_limit_bytes=48 * 1024 * 1024,    # headroom over the ~18 MB working set
        ),
    )(x, w_fused_bf16)
    return out


def _reference_forward(phrase, linear_w):
    """Pure-JAX f32 reference matching the PyTorch semantics (identity submodules)."""
    pitch = phrase
    time = phrase
    out = jnp.concatenate((pitch, time), axis=1)          # [B, 1024, 12, 2]
    out = jnp.mean(out, axis=(2, 3))                      # AvgPool2d((12,2))
    out = out.reshape(-1, 1024)                           # view(-1, 1024)
    return out @ linear_w.T                               # Linear(1024, 1152, bias=False)


if __name__ == "__main__":
    key = jax.random.PRNGKey(0)
    k_x, k_w = jax.random.split(key)

    B, C, H, W = 2, 512, 12, 2                            # smallest shapes consistent with
                                                          # view(-1, 1024) after AvgPool2d((12,2))
    phrase = jax.random.normal(k_x, (B, C, H, W), dtype=jnp.float32)
    # weights_init definition not provided; deterministic normal init instead.
    linear_w = 0.02 * jax.random.normal(k_w, (1152, 1024), dtype=jnp.float32)

    # model-load-time weight prep (hoisted out of the per-call path)
    w_fused = prepare_fused_weight(linear_w)

    z = phrase_model_forward(phrase, w_fused)
    z = jax.block_until_ready(z)

    z_ref = _reference_forward(phrase, linear_w)
    assert z.shape == (B, 1152), z.shape
    # bf16 weights/activations with f32 accumulation -> loosened tolerance vs f32 ref
    assert jnp.allclose(z, z_ref, atol=2e-2, rtol=2e-2), "mismatch vs reference"

    print("KERNEL_OK")
</pallas_src>

<mosaic_0001>
module attributes {stable_mosaic.version = 11 : i64} {
  func.func @_phrase_head_kernel(%arg0: i32, %arg1: memref<2x24x512xbf16, #tpu.memory_space<vmem>>, %arg2: memref<512x1152xbf16, #tpu.memory_space<vmem>>, %arg3: memref<2x1152xf32, #tpu.memory_space<vmem>>) attributes {dimension_semantics = [#tpu.dimension_semantics<parallel>], iteration_bounds = array<i64: 1>, scalar_prefetch = 0 : i64, scratch_operands = 0 : i64, tpu.core_type = #tpu.core_type<tc>, window_params = [{transform_indices = @transform_0, window_bounds = array<i64: 2, 24, 512>}, {pipeline_mode = #tpu.pipeline_mode<synchronous>, transform_indices = @transform_1, window_bounds = array<i64: 512, 1152>}, {transform_indices = @transform_2, window_bounds = array<i64: 2, 1152>}]} {
    %c0 = arith.constant 0 : index
    %c0_0 = arith.constant 0 : index
    %c0_1 = arith.constant 0 : index
    %0 = vector.load %arg1[%c0, %c0_0, %c0_1] : memref<2x24x512xbf16, #tpu.memory_space<vmem>>, vector<2x24x512xbf16>
    %1 = arith.extf %0 : vector<2x24x512xbf16> to vector<2x24x512xf32>
    %cst = arith.constant dense<0.000000e+00> : vector<2x512xf32>
    %2 = vector.multi_reduction <add>, %1, %cst [1] : vector<2x24x512xf32> to vector<2x512xf32>
    %cst_2 = arith.constant 2.400000e+01 : f32
    %3 = vector.broadcast %cst_2 : f32 to vector<2x512xf32>
    %4 = arith.divf %2, %3 : vector<2x512xf32>
    %5 = arith.truncf %4 : vector<2x512xf32> to vector<2x512xbf16>
    %c0_3 = arith.constant 0 : index
    %c0_4 = arith.constant 0 : index
    %6 = vector.load %arg2[%c0_3, %c0_4] : memref<512x1152xbf16, #tpu.memory_space<vmem>>, vector<512x1152xbf16>
    %cst_5 = arith.constant dense<0.000000e+00> : vector<2x1152xf32>
    %7 = tpu.matmul %5, %6, %cst_5 {dimension_numbers = #tpu.dot_dimension_numbers<[1], [0], [0], [1], [0, 0, 1, 1], [], []>} : vector<2x512xbf16>, vector<512x1152xbf16>, vector<2x1152xf32> -> vector<2x1152xf32>
    %c0_6 = arith.constant 0 : index
    %c0_7 = arith.constant 0 : index
    %8 = vector.load %arg3[%c0_6, %c0_7] : memref<2x1152xf32, #tpu.memory_space<vmem>>, vector<2x1152xf32>
    tpu.vector_store %arg3[%c0_6, %c0_7], %7 {strides = array<i32>} : memref<2x1152xf32, #tpu.memory_space<vmem>>, vector<2x1152xf32>,
    return
  }
  func.func @transform_0(%arg0: i32) -> (i32, i32, i32) {
    %c0_i32 = arith.constant 0 : i32
    %c0_i32_0 = arith.constant 0 : i32
    %c0_i32_1 = arith.constant 0 : i32
    return %arg0, %c0_i32, %c0_i32_0 : i32, i32, i32
  }
  func.func @transform_1(%arg0: i32) -> (i32, i32) {
    %c0_i32 = arith.constant 0 : i32
    %c0_i32_0 = arith.constant 0 : i32
    %c0_i32_1 = arith.constant 0 : i32
    return %c0_i32, %c0_i32_0 : i32, i32
  }
  func.func @transform_2(%arg0: i32) -> (i32, i32) {
    %c0_i32 = arith.constant 0 : i32
    %c0_i32_0 = arith.constant 0 : i32
    return %arg0, %c0_i32 : i32, i32
  }
}

</mosaic_0001>

<llo_original>
// kernel: tpu_custom_call.1
$region0: #{tpu_custom_call.1}
  #allocation0 [shape = 'u32[]', space=smem, size = 0x4, offset = 0x4, fixed_abs, tag = 'smem constant byte address 0x4 - core index']
  #allocation1 [shape = 'u32[144,128]{1,0:T(1,128)}', space=vmem, size = 0x12000, scoped, tag = 'internal scratch']
  %s0 = inlined_call_operand.hbm [shape: bf16[2,24,512], index: 0, kind: input, shape index: {}]
  %s1 = inlined_call_operand.hbm [shape: bf16[512,1152], index: 1, kind: input, shape index: {}]
  %s2 = inlined_call_operand.hbm [shape: f32[2,1152], index: 2, kind: output, shape index: {}]
  %s3 = sld [smem:[#allocation0]]
  $region26: #{tpu_custom_call.1} parent=0
    _
  %s5 = ssub.s32 1, %s3
  %s6 = scalar_select 0, %s5, %s3
  $region1: #{tpu_custom_call.1} parent=0
    #allocation2 [shape = 'u8[49152]{0}', space=vmem, size = 0xc000, scoped, tag = 'input window, operand 0, single buffered']
    #allocation3 [shape = 's32[1]{0}', space=sflag, size = 0x4, scoped, tag = 'scoped memory for tpu_custom_call.1']
    #allocation4 [shape = 's32[1]{0}', space=sflag, size = 0x4, scoped, tag = 'scoped memory for tpu_custom_call.1']
    #allocation5 [shape = 'u8[1179648]{0}', space=vmem, size = 0x120000, scoped, tag = 'input window, operand 1, single buffered']
    #allocation6 [shape = 's32[1]{0}', space=sflag, size = 0x4, scoped, tag = 'scoped memory for tpu_custom_call.1']
    #allocation7 [shape = 'u8[9216]{0}', space=vmem, size = 0x2400, scoped, tag = 'output window, operand 0, single buffered']
    %7 = vsyncpa [#allocation3], 0
    %8 = vsyncpa [#allocation6], 0
    %9 = vsyncpa [#allocation4], 0
    // Predicated region
    $region2: #{tpu_custom_call.1} parent=1 // pred_check
      _
    $region3: #{tpu_custom_call.1} parent=1 // pred_check_branch
      %11 = sbr.rel (0) target = $region5
    $region4: #{tpu_custom_call.1} parent=1 // pred_region
      %s13 = ssub.s32 1536, 1536
      %14 = vsyncadd [#allocation3], %s13
      %s15 = sshll.u32 [#allocation2], 4
      %s16 = int_to_ptr.vmem [resolvable:$true] %s15
      %21 = dma.hbm_to_vmem [thread:$0]  %s0, 1536, %s16, [#allocation3], 256, 256, 16
    $region5: #{tpu_custom_call.1} parent=1 // pred_fallthru
      _
    // Predicated region
    $region6: #{tpu_custom_call.1} parent=1 // pred_check
      _
    $region7: #{tpu_custom_call.1} parent=1 // pred_check_branch
      %23 = sbr.rel (0) target = $region9
    $region8: #{tpu_custom_call.1} parent=1 // pred_region
      %s25 = ssub.s32 36864, 36864
      %26 = vsyncadd [#allocation6], %s25
      %s27 = sshll.u32 [#allocation5], 4
      %s28 = int_to_ptr.vmem [resolvable:$true] %s27
      %33 = dma.hbm_to_vmem [thread:$0]  %s1, 36864, %s28, [#allocation6], 576, 576, 36
    $region9: #{tpu_custom_call.1} parent=1 // pred_fallthru
      _
    // Predicated region
    $region10: #{tpu_custom_call.1} parent=1 // pred_check
      _
    $region11: #{tpu_custom_call.1} parent=1 // pred_check_branch
      %35 = sbr.rel (0) target = $region13
    $region12: #{tpu_custom_call.1} parent=1 // pred_region
      %36 = dma.done [#allocation3], 1536
    $region13: #{tpu_custom_call.1} parent=1 // pred_fallthru
      _
    // Predicated region
    $region14: #{tpu_custom_call.1} parent=1 // pred_check
      _
    $region15: #{tpu_custom_call.1} parent=1 // pred_check_branch
      %38 = sbr.rel (0) target = $region17
    $region16: #{tpu_custom_call.1} parent=1 // pred_region
      %39 = dma.done [#allocation6], 36864
    $region17: #{tpu_custom_call.1} parent=1 // pred_fallthru
      _
    %v41 = vld [vmem:[#allocation2] sm:$0xff]
    %v42 = vld [vmem:[#allocation2 + $0x8] sm:$0xff]
    %v43 = vld [vmem:[#allocation2 + $0x10] sm:$0xff]
    %v44 = vld [vmem:[#allocation2 + $0x18] sm:$0xff]
    %v45 = vld [vmem:[#allocation2 + $0x20] sm:$0xff]
    %v46 = vld [vmem:[#allocation2 + $0x28] sm:$0xff]
    %v47 = vld [vmem:[#allocation2 + $0x30] sm:$0xff]
    %v48 = vld [vmem:[#allocation2 + $0x38] sm:$0xff]
    %v49 = vld [vmem:[#allocation2 + $0x40] sm:$0xff]
    %v50 = vld [vmem:[#allocation2 + $0x48] sm:$0xff]
    %v51 = vld [vmem:[#allocation2 + $0x50] sm:$0xff]
    %v52 = vld [vmem:[#allocation2 + $0x58] sm:$0xff]
    %v53 = vunpack.c.l.bf16 %v41
    %v54 = vunpack.c.h.bf16 %v41
    %v55 = vunpack.c.l.bf16 %v42
    %v56 = vunpack.c.h.bf16 %v42
    %v57 = vunpack.c.l.bf16 %v43
    %v58 = vunpack.c.h.bf16 %v43
    %v59 = vunpack.c.l.bf16 %v44
    %v60 = vunpack.c.h.bf16 %v44
    %v61 = vunpack.c.l.bf16 %v45
    %v62 = vunpack.c.h.bf16 %v45
    %v63 = vunpack.c.l.bf16 %v46
    %v64 = vunpack.c.h.bf16 %v46
    %v65 = vunpack.c.l.bf16 %v47
    %v66 = vunpack.c.h.bf16 %v47
    %v67 = vunpack.c.l.bf16 %v48
    %v68 = vunpack.c.h.bf16 %v48
    %v69 = vunpack.c.l.bf16 %v49
    %v70 = vunpack.c.h.bf16 %v49
    %v71 = vunpack.c.l.bf16 %v50
    %v72 = vunpack.c.h.bf16 %v50
    %v73 = vunpack.c.l.bf16 %v51
    %v74 = vunpack.c.h.bf16 %v51
    %v75 = vunpack.c.l.bf16 %v52
    %v76 = vunpack.c.h.bf16 %v52
    %v77 = vadd.f32 %v53, %v57
    %v78 = vadd.f32 %v77, %v61
    %v79 = vrot.slane %v78, 4
    %v80 = vadd.f32 %v78, %v79
    %v81 = vrot.slane %v80, 2
    %v82 = vadd.f32 %v80, %v81
    %v83 = vrot.slane %v82, 1
    %v84 = vadd.f32 %v82, %v83
    %v85 = vadd.f32 %v54, %v58
    %v86 = vadd.f32 %v85, %v62
    %v87 = vrot.slane %v86, 4
    %v88 = vadd.f32 %v86, %v87
    %v89 = vrot.slane %v88, 2
    %v90 = vadd.f32 %v88, %v89
    %v91 = vrot.slane %v90, 1
    %v92 = vadd.f32 %v90, %v91
    %v93 = vadd.f32 %v55, %v59
    %v94 = vadd.f32 %v93, %v63
    %v95 = vrot.slane %v94, 4
    %v96 = vadd.f32 %v94, %v95
    %v97 = vrot.slane %v96, 2
    %v98 = vadd.f32 %v96, %v97
    %v99 = vrot.slane %v98, 1
    %v100 = vadd.f32 %v98, %v99
    %v101 = vadd.f32 %v56, %v60
    %v102 = vadd.f32 %v101, %v64
    %v103 = vrot.slane %v102, 4
    %v104 = vadd.f32 %v102, %v103
    %v105 = vrot.slane %v104, 2
    %v106 = vadd.f32 %v104, %v105
    %v107 = vrot.slane %v106, 1
    %v108 = vadd.f32 %v106, %v107
    %v109 = vadd.f32 %v65, %v69
    %v110 = vadd.f32 %v109, %v73
    %v111 = vrot.slane %v110, 4
    %v112 = vadd.f32 %v110, %v111
    %v113 = vrot.slane %v112, 2
    %v114 = vadd.f32 %v112, %v113
    %v115 = vrot.slane %v114, 1
    %v116 = vadd.f32 %v114, %v115
    %v117 = vadd.f32 %v66, %v70
    %v118 = vadd.f32 %v117, %v74
    %v119 = vrot.slane %v118, 4
    %v120 = vadd.f32 %v118, %v119
    %v121 = vrot.slane %v120, 2
    %v122 = vadd.f32 %v120, %v121
    %v123 = vrot.slane %v122, 1
    %v124 = vadd.f32 %v122, %v123
    %v125 = vadd.f32 %v67, %v71
    %v126 = vadd.f32 %v125, %v75
    %v127 = vrot.slane %v126, 4
    %v128 = vadd.f32 %v126, %v127
    %v129 = vrot.slane %v128, 2
    %v130 = vadd.f32 %v128, %v129
    %v131 = vrot.slane %v130, 1
    %v132 = vadd.f32 %v130, %v131
    %v133 = vadd.f32 %v68, %v72
    %v134 = vadd.f32 %v133, %v76
    %v135 = vrot.slane %v134, 4
    %v136 = vadd.f32 %v134, %v135
    %v137 = vrot.slane %v136, 2
    %v138 = vadd.f32 %v136, %v137
    %v139 = vrot.slane %v138, 1
    %v140 = vadd.f32 %v138, %v139
    %v141 = vrcp.pop 24.0
    %v142 = vmul.f32 %v84, %v141
    %v143 = vmul.f32 %v92, %v141
    %v144 = vmul.f32 %v100, %v141
    %v145 = vmul.f32 %v108, %v141
    %v146 = vmul.f32 %v116, %v141
    %v147 = vmul.f32 %v124, %v141
    %v148 = vmul.f32 %v132, %v141
    %v149 = vmul.f32 %v140, %v141
    %v150 = vpack.c.bf16 %v142, %v142
    %v151 = vpack.c.bf16 %v143, %v143
    %v152 = vpack.c.bf16 %v144, %v144
    %v153 = vpack.c.bf16 %v145, %v145
    %v154 = vpack.c.bf16 %v146, %v146
    %v155 = vpack.c.bf16 %v147, %v147
    %v156 = vpack.c.bf16 %v148, %v148
    %v157 = vpack.c.bf16 %v149, %v149
    %v158 = vld [vmem:[#allocation5] sm:$0xff]
    %v159 = vld [vmem:[#allocation5 + $0x8] sm:$0xff]
    %v160 = vld [vmem:[#allocation5 + $0x10] sm:$0xff]
    %v161 = vld [vmem:[#allocation5 + $0x18] sm:$0xff]
    %v162 = vld [vmem:[#allocation5 + $0x20] sm:$0xf]
    %v163 = vld [vmem:[#allocation5 + $0x24] sm:$0xff]
    %v164 = vld [vmem:[#allocation5 + $0x2c] sm:$0xff]
    %v165 = vld [vmem:[#allocation5 + $0x34] sm:$0xff]
    %v166 = vld [vmem:[#allocation5 + $0x3c] sm:$0xff]
    %v167 = vld [vmem:[#allocation5 + $0x44] sm:$0xf]
    %v168 = vld [vmem:[#allocation5 + $0x48] sm:$0xff]
    %v169 = vld [vmem:[#allocation5 + $0x50] sm:$0xff]
    %v170 = vld [vmem:[#allocation5 + $0x58] sm:$0xff]
    %v171 = vld [vmem:[#allocation5 + $0x60] sm:$0xff]
    %v172 = vld [vmem:[#allocation5 + $0x68] sm:$0xf]
    %v173 = vld [vmem:[#allocation5 + $0x6c] sm:$0xff]
    %v174 = vld [vmem:[#allocation5 + $0x74] sm:$0xff]
    %v175 = vld [vmem:[#allocation5 + $0x7c] sm:$0xff]
    %v176 = vld [vmem:[#allocation5 + $0x84] sm:$0xff]
    %v177 = vld [vmem:[#allocation5 + $0x8c] sm:$0xf]
    %v178 = vld [vmem:[#allocation5 + $0x90] sm:$0xff]
    %v179 = vld [vmem:[#allocation5 + $0x98] sm:$0xff]
    %v180 = vld [vmem:[#allocation5 + $0xa0] sm:$0xff]
    %v181 = vld [vmem:[#allocation5 + $0xa8] sm:$0xff]
    %v182 = vld [vmem:[#allocation5 + $0xb0] sm:$0xf]
    %v183 = vld [vmem:[#allocation5 + $0xb4] sm:$0xff]
    %v184 = vld [vmem:[#allocation5 + $0xbc] sm:$0xff]
    %v185 = vld [vmem:[#allocation5 + $0xc4] sm:$0xff]
    %v186 = vld [vmem:[#allocation5 + $0xcc] sm:$0xff]
    %v187 = vld [vmem:[#allocation5 + $0xd4] sm:$0xf]
    %v188 = vld [vmem:[#allocation5 + $0xd8] sm:$0xff]
    %v189 = vld [vmem:[#allocation5 + $0xe0] sm:$0xff]
    %v190 = vld [vmem:[#allocation5 + $0xe8] sm:$0xff]
    %v191 = vld [vmem:[#allocation5 + $0xf0] sm:$0xff]
    %v192 = vld [vmem:[#allocation5 + $0xf8] sm:$0xf]
    %v193 = vld [vmem:[#allocation5 + $0xfc] sm:$0xff]
    %v194 = vld [vmem:[#allocation5 + $0x104] sm:$0xff]
    %v195 = vld [vmem:[#allocation5 + $0x10c] sm:$0xff]
    %v196 = vld [vmem:[#allocation5 + $0x114] sm:$0xff]
    %v197 = vld [vmem:[#allocation5 + $0x11c] sm:$0xf]
    %v198 = vld [vmem:[#allocation5 + $0x120] sm:$0xff]
    %v199 = vld [vmem:[#allocation5 + $0x128] sm:$0xff]
    %v200 = vld [vmem:[#allocation5 + $0x130] sm:$0xff]
    %v201 = vld [vmem:[#allocation5 + $0x138] sm:$0xff]
    %v202 = vld [vmem:[#allocation5 + $0x140] sm:$0xf]
    %v203 = vld [vmem:[#allocation5 + $0x144] sm:$0xff]
    %v204 = vld [vmem:[#allocation5 + $0x14c] sm:$0xff]
    %v205 = vld [vmem:[#allocation5 + $0x154] sm:$0xff]
    %v206 = vld [vmem:[#allocation5 + $0x15c] sm:$0xff]
    %v207 = vld [vmem:[#allocation5 + $0x164] sm:$0xf]
    %v208 = vld [vmem:[#allocation5 + $0x168] sm:$0xff]
    %v209 = vld [vmem:[#allocation5 + $0x170] sm:$0xff]
    %v210 = vld [vmem:[#allocation5 + $0x178] sm:$0xff]
    %v211 = vld [vmem:[#allocation5 + $0x180] sm:$0xff]
    %v212 = vld [vmem:[#allocation5 + $0x188] sm:$0xf]
    %v213 = vld [vmem:[#allocation5 + $0x18c] sm:$0xff]
    %v214 = vld [vmem:[#allocation5 + $0x194] sm:$0xff]
    %v215 = vld [vmem:[#allocation5 + $0x19c] sm:$0xff]
    %v216 = vld [vmem:[#allocation5 + $0x1a4] sm:$0xff]
    %v217 = vld [vmem:[#allocation5 + $0x1ac] sm:$0xf]
    %v218 = vld [vmem:[#allocation5 + $0x1b0] sm:$0xff]
    %v219 = vld [vmem:[#allocation5 + $0x1b8] sm:$0xff]
    %v220 = vld [vmem:[#allocation5 + $0x1c0] sm:$0xff]
    %v221 = vld [vmem:[#allocation5 + $0x1c8] sm:$0xff]
    %v222 = vld [vmem:[#allocation5 + $0x1d0] sm:$0xf]
    %v223 = vld [vmem:[#allocation5 + $0x1d4] sm:$0xff]
    %v224 = vld [vmem:[#allocation5 + $0x1dc] sm:$0xff]
    %v225 = vld [vmem:[#allocation5 + $0x1e4] sm:$0xff]
    %v226 = vld [vmem:[#allocation5 + $0x1ec] sm:$0xff]
    %v227 = vld [vmem:[#allocation5 + $0x1f4] sm:$0xf]
    %v228 = vld [vmem:[#allocation5 + $0x1f8] sm:$0xff]
    %v229 = vld [vmem:[#allocation5 + $0x200] sm:$0xff]
    %v230 = vld [vmem:[#allocation5 + $0x208] sm:$0xff]
    %v231 = vld [vmem:[#allocation5 + $0x210] sm:$0xff]
    %v232 = vld [vmem:[#allocation5 + $0x218] sm:$0xf]
    %v233 = vld [vmem:[#allocation5 + $0x21c] sm:$0xff]
    %v234 = vld [vmem:[#allocation5 + $0x224] sm:$0xff]
    %v235 = vld [vmem:[#allocation5 + $0x22c] sm:$0xff]
    %v236 = vld [vmem:[#allocation5 + $0x234] sm:$0xff]
    %v237 = vld [vmem:[#allocation5 + $0x23c] sm:$0xf]
    %v238 = vld [vmem:[#allocation5 + $0x240] sm:$0xff]
    %v239 = vld [vmem:[#allocation5 + $0x248] sm:$0xff]
    %v240 = vld [vmem:[#allocation5 + $0x250] sm:$0xff]
    %v241 = vld [vmem:[#allocation5 + $0x258] sm:$0xff]
    %v242 = vld [vmem:[#allocation5 + $0x260] sm:$0xf]
    %v243 = vld [vmem:[#allocation5 + $0x264] sm:$0xff]
    %v244 = vld [vmem:[#allocation5 + $0x26c] sm:$0xff]
    %v245 = vld [vmem:[#allocation5 + $0x274] sm:$0xff]
    %v246 = vld [vmem:[#allocation5 + $0x27c] sm:$0xff]
    %v247 = vld [vmem:[#allocation5 + $0x284] sm:$0xf]
    %v248 = vld [vmem:[#allocation5 + $0x288] sm:$0xff]
    %v249 = vld [vmem:[#allocation5 + $0x290] sm:$0xff]
    %v250 = vld [vmem:[#allocation5 + $0x298] sm:$0xff]
    %v251 = vld [vmem:[#allocation5 + $0x2a0] sm:$0xff]
    %v252 = vld [vmem:[#allocation5 + $0x2a8] sm:$0xf]
    %v253 = vld [vmem:[#allocation5 + $0x2ac] sm:$0xff]
    %v254 = vld [vmem:[#allocation5 + $0x2b4] sm:$0xff]
    %v255 = vld [vmem:[#allocation5 + $0x2bc] sm:$0xff]
    %v256 = vld [vmem:[#allocation5 + $0x2c4] sm:$0xff]
    %v257 = vld [vmem:[#allocation5 + $0x2cc] sm:$0xf]
    %v258 = vld [vmem:[#allocation5 + $0x2d0] sm:$0xff]
    %v259 = vld [vmem:[#allocation5 + $0x2d8] sm:$0xff]
    %v260 = vld [vmem:[#allocation5 + $0x2e0] sm:$0xff]
    %v261 = vld [vmem:[#allocation5 + $0x2e8] sm:$0xff]
    %v262 = vld [vmem:[#allocation5 + $0x2f0] sm:$0xf]
    %v263 = vld [vmem:[#allocation5 + $0x2f4] sm:$0xff]
    %v264 = vld [vmem:[#allocation5 + $0x2fc] sm:$0xff]
    %v265 = vld [vmem:[#allocation5 + $0x304] sm:$0xff]
    %v266 = vld [vmem:[#allocation5 + $0x30c] sm:$0xff]
    %v267 = vld [vmem:[#allocation5 + $0x314] sm:$0xf]
    %v268 = vld [vmem:[#allocation5 + $0x318] sm:$0xff]
    %v269 = vld [vmem:[#allocation5 + $0x320] sm:$0xff]
    %v270 = vld [vmem:[#allocation5 + $0x328] sm:$0xff]
    %v271 = vld [vmem:[#allocation5 + $0x330] sm:$0xff]
    %v272 = vld [vmem:[#allocation5 + $0x338] sm:$0xf]
    %v273 = vld [vmem:[#allocation5 + $0x33c] sm:$0xff]
    %v274 = vld [vmem:[#allocation5 + $0x344] sm:$0xff]
    %v275 = vld [vmem:[#allocation5 + $0x34c] sm:$0xff]
    %v276 = vld [vmem:[#allocation5 + $0x354] sm:$0xff]
    %v277 = vld [vmem:[#allocation5 + $0x35c] sm:$0xf]
    %v278 = vld [vmem:[#allocation5 + $0x360] sm:$0xff]
    %v279 = vld [vmem:[#allocation5 + $0x368] sm:$0xff]
    %v280 = vld [vmem:[#allocation5 + $0x370] sm:$0xff]
    %v281 = vld [vmem:[#allocation5 + $0x378] sm:$0xff]
    %v282 = vld [vmem:[#allocation5 + $0x380] sm:$0xf]
    %v283 = vld [vmem:[#allocation5 + $0x384] sm:$0xff]
    %v284 = vld [vmem:[#allocation5 + $0x38c] sm:$0xff]
    %v285 = vld [vmem:[#allocation5 + $0x394] sm:$0xff]
    %v286 = vld [vmem:[#allocation5 + $0x39c] sm:$0xff]
    %v287 = vld [vmem:[#allocation5 + $0x3a4] sm:$0xf]
    %v288 = vld [vmem:[#allocation5 + $0x3a8] sm:$0xff]
    %v289 = vld [vmem:[#allocation5 + $0x3b0] sm:$0xff]
    %v290 = vld [vmem:[#allocation5 + $0x3b8] sm:$0xff]
    %v291 = vld [vmem:[#allocation5 + $0x3c0] sm:$0xff]
    %v292 = vld [vmem:[#allocation5 + $0x3c8] sm:$0xf]
    %v293 = vld [vmem:[#allocation5 + $0x3cc] sm:$0xff]
    %v294 = vld [vmem:[#allocation5 + $0x3d4] sm:$0xff]
    %v295 = vld [vmem:[#allocation5 + $0x3dc] sm:$0xff]
    %v296 = vld [vmem:[#allocation5 + $0x3e4] sm:$0xff]
    %v297 = vld [vmem:[#allocation5 + $0x3ec] sm:$0xf]
    %v298 = vld [vmem:[#allocation5 + $0x3f0] sm:$0xff]
    %v299 = vld [vmem:[#allocation5 + $0x3f8] sm:$0xff]
    %v300 = vld [vmem:[#allocation5 + $0x400] sm:$0xff]
    %v301 = vld [vmem:[#allocation5 + $0x408] sm:$0xff]
    %v302 = vld [vmem:[#allocation5 + $0x410] sm:$0xf]
    %v303 = vld [vmem:[#allocation5 + $0x414] sm:$0xff]
    %v304 = vld [vmem:[#allocation5 + $0x41c] sm:$0xff]
    %v305 = vld [vmem:[#allocation5 + $0x424] sm:$0xff]
    %v306 = vld [vmem:[#allocation5 + $0x42c] sm:$0xff]
    %v307 = vld [vmem:[#allocation5 + $0x434] sm:$0xf]
    %v308 = vld [vmem:[#allocation5 + $0x438] sm:$0xff]
    %v309 = vld [vmem:[#allocation5 + $0x440] sm:$0xff]
    %v310 = vld [vmem:[#allocation5 + $0x448] sm:$0xff]
    %v311 = vld [vmem:[#allocation5 + $0x450] sm:$0xff]
    %v312 = vld [vmem:[#allocation5 + $0x458] sm:$0xf]
    %v313 = vld [vmem:[#allocation5 + $0x45c] sm:$0xff]
    %v314 = vld [vmem:[#allocation5 + $0x464] sm:$0xff]
    %v315 = vld [vmem:[#allocation5 + $0x46c] sm:$0xff]
    %v316 = vld [vmem:[#allocation5 + $0x474] sm:$0xff]
    %v317 = vld [vmem:[#allocation5 + $0x47c] sm:$0xf]
    %v318 = vld [vmem:[#allocation5 + $0x480] sm:$0xff]
    %v319 = vld [vmem:[#allocation5 + $0x488] sm:$0xff]
    %v320 = vld [vmem:[#allocation5 + $0x490] sm:$0xff]
    %v321 = vld [vmem:[#allocation5 + $0x498] sm:$0xff]
    %v322 = vld [vmem:[#allocation5 + $0x4a0] sm:$0xf]
    %v323 = vld [vmem:[#allocation5 + $0x4a4] sm:$0xff]
    %v324 = vld [vmem:[#allocation5 + $0x4ac] sm:$0xff]
    %v325 = vld [vmem:[#allocation5 + $0x4b4] sm:$0xff]
    %v326 = vld [vmem:[#allocation5 + $0x4bc] sm:$0xff]
    %v327 = vld [vmem:[#allocation5 + $0x4c4] sm:$0xf]
    %v328 = vld [vmem:[#allocation5 + $0x4c8] sm:$0xff]
    %v329 = vld [vmem:[#allocation5 + $0x4d0] sm:$0xff]
    %v330 = vld [vmem:[#allocation5 + $0x4d8] sm:$0xff]
    %v331 = vld [vmem:[#allocation5 + $0x4e0] sm:$0xff]
    %v332 = vld [vmem:[#allocation5 + $0x4e8] sm:$0xf]
    %v333 = vld [vmem:[#allocation5 + $0x4ec] sm:$0xff]
    %v334 = vld [vmem:[#allocation5 + $0x4f4] sm:$0xff]
    %v335 = vld [vmem:[#allocation5 + $0x4fc] sm:$0xff]
    %v336 = vld [vmem:[#allocation5 + $0x504] sm:$0xff]
    %v337 = vld [vmem:[#allocation5 + $0x50c] sm:$0xf]
    %v338 = vld [vmem:[#allocation5 + $0x510] sm:$0xff]
    %v339 = vld [vmem:[#allocation5 + $0x518] sm:$0xff]
    %v340 = vld [vmem:[#allocation5 + $0x520] sm:$0xff]
    %v341 = vld [vmem:[#allocation5 + $0x528] sm:$0xff]
    %v342 = vld [vmem:[#allocation5 + $0x530] sm:$0xf]
    %v343 = vld [vmem:[#allocation5 + $0x534] sm:$0xff]
    %v344 = vld [vmem:[#allocation5 + $0x53c] sm:$0xff]
    %v345 = vld [vmem:[#allocation5 + $0x544] sm:$0xff]
    %v346 = vld [vmem:[#allocation5 + $0x54c] sm:$0xff]
    %v347 = vld [vmem:[#allocation5 + $0x554] sm:$0xf]
    %v348 = vld [vmem:[#allocation5 + $0x558] sm:$0xff]
    %v349 = vld [vmem:[#allocation5 + $0x560] sm:$0xff]
    %v350 = vld [vmem:[#allocation5 + $0x568] sm:$0xff]
    %v351 = vld [vmem:[#allocation5 + $0x570] sm:$0xff]
    %v352 = vld [vmem:[#allocation5 + $0x578] sm:$0xf]
    %v353 = vld [vmem:[#allocation5 + $0x57c] sm:$0xff]
    %v354 = vld [vmem:[#allocation5 + $0x584] sm:$0xff]
    %v355 = vld [vmem:[#allocation5 + $0x58c] sm:$0xff]
    %v356 = vld [vmem:[#allocation5 + $0x594] sm:$0xff]
    %v357 = vld [vmem:[#allocation5 + $0x59c] sm:$0xf]
    %v358 = vld [vmem:[#allocation5 + $0x5a0] sm:$0xff]
    %v359 = vld [vmem:[#allocation5 + $0x5a8] sm:$0xff]
    %v360 = vld [vmem:[#allocation5 + $0x5b0] sm:$0xff]
    %v361 = vld [vmem:[#allocation5 + $0x5b8] sm:$0xff]
    %v362 = vld [vmem:[#allocation5 + $0x5c0] sm:$0xf]
    %v363 = vld [vmem:[#allocation5 + $0x5c4] sm:$0xff]
    %v364 = vld [vmem:[#allocation5 + $0x5cc] sm:$0xff]
    %v365 = vld [vmem:[#allocation5 + $0x5d4] sm:$0xff]
    %v366 = vld [vmem:[#allocation5 + $0x5dc] sm:$0xff]
    %v367 = vld [vmem:[#allocation5 + $0x5e4] sm:$0xf]
    %v368 = vld [vmem:[#allocation5 + $0x5e8] sm:$0xff]
    %v369 = vld [vmem:[#allocation5 + $0x5f0] sm:$0xff]
    %v370 = vld [vmem:[#allocation5 + $0x5f8] sm:$0xff]
    %v371 = vld [vmem:[#allocation5 + $0x600] sm:$0xff]
    %v372 = vld [vmem:[#allocation5 + $0x608] sm:$0xf]
    %v373 = vld [vmem:[#allocation5 + $0x60c] sm:$0xff]
    %v374 = vld [vmem:[#allocation5 + $0x614] sm:$0xff]
    %v375 = vld [vmem:[#allocation5 + $0x61c] sm:$0xff]
    %v376 = vld [vmem:[#allocation5 + $0x624] sm:$0xff]
    %v377 = vld [vmem:[#allocation5 + $0x62c] sm:$0xf]
    %v378 = vld [vmem:[#allocation5 + $0x630] sm:$0xff]
    %v379 = vld [vmem:[#allocation5 + $0x638] sm:$0xff]
    %v380 = vld [vmem:[#allocation5 + $0x640] sm:$0xff]
    %v381 = vld [vmem:[#allocation5 + $0x648] sm:$0xff]
    %v382 = vld [vmem:[#allocation5 + $0x650] sm:$0xf]
    %v383 = vld [vmem:[#allocation5 + $0x654] sm:$0xff]
    %v384 = vld [vmem:[#allocation5 + $0x65c] sm:$0xff]
    %v385 = vld [vmem:[#allocation5 + $0x664] sm:$0xff]
    %v386 = vld [vmem:[#allocation5 + $0x66c] sm:$0xff]
    %v387 = vld [vmem:[#allocation5 + $0x674] sm:$0xf]
    %v388 = vld [vmem:[#allocation5 + $0x678] sm:$0xff]
    %v389 = vld [vmem:[#allocation5 + $0x680] sm:$0xff]
    %v390 = vld [vmem:[#allocation5 + $0x688] sm:$0xff]
    %v391 = vld [vmem:[#allocation5 + $0x690] sm:$0xff]
    %v392 = vld [vmem:[#allocation5 + $0x698] sm:$0xf]
    %v393 = vld [vmem:[#allocation5 + $0x69c] sm:$0xff]
    %v394 = vld [vmem:[#allocation5 + $0x6a4] sm:$0xff]
    %v395 = vld [vmem:[#allocation5 + $0x6ac] sm:$0xff]
    %v396 = vld [vmem:[#allocation5 + $0x6b4] sm:$0xff]
    %v397 = vld [vmem:[#allocation5 + $0x6bc] sm:$0xf]
    %v398 = vld [vmem:[#allocation5 + $0x6c0] sm:$0xff]
    %v399 = vld [vmem:[#allocation5 + $0x6c8] sm:$0xff]
    %v400 = vld [vmem:[#allocation5 + $0x6d0] sm:$0xff]
    %v401 = vld [vmem:[#allocation5 + $0x6d8] sm:$0xff]
    %v402 = vld [vmem:[#allocation5 + $0x6e0] sm:$0xf]
    %v403 = vld [vmem:[#allocation5 + $0x6e4] sm:$0xff]
    %v404 = vld [vmem:[#allocation5 + $0x6ec] sm:$0xff]
    %v405 = vld [vmem:[#allocation5 + $0x6f4] sm:$0xff]
    %v406 = vld [vmem:[#allocation5 + $0x6fc] sm:$0xff]
    %v407 = vld [vmem:[#allocation5 + $0x704] sm:$0xf]
    %v408 = vld [vmem:[#allocation5 + $0x708] sm:$0xff]
    %v409 = vld [vmem:[#allocation5 + $0x710] sm:$0xff]
    %v410 = vld [vmem:[#allocation5 + $0x718] sm:$0xff]
    %v411 = vld [vmem:[#allocation5 + $0x720] sm:$0xff]
    %v412 = vld [vmem:[#allocation5 + $0x728] sm:$0xf]
    %v413 = vld [vmem:[#allocation5 + $0x72c] sm:$0xff]
    %v414 = vld [vmem:[#allocation5 + $0x734] sm:$0xff]
    %v415 = vld [vmem:[#allocation5 + $0x73c] sm:$0xff]
    %v416 = vld [vmem:[#allocation5 + $0x744] sm:$0xff]
    %v417 = vld [vmem:[#allocation5 + $0x74c] sm:$0xf]
    %v418 = vld [vmem:[#allocation5 + $0x750] sm:$0xff]
    %v419 = vld [vmem:[#allocation5 + $0x758] sm:$0xff]
    %v420 = vld [vmem:[#allocation5 + $0x760] sm:$0xff]
    %v421 = vld [vmem:[#allocation5 + $0x768] sm:$0xff]
    %v422 = vld [vmem:[#allocation5 + $0x770] sm:$0xf]
    %v423 = vld [vmem:[#allocation5 + $0x774] sm:$0xff]
    %v424 = vld [vmem:[#allocation5 + $0x77c] sm:$0xff]
    %v425 = vld [vmem:[#allocation5 + $0x784] sm:$0xff]
    %v426 = vld [vmem:[#allocation5 + $0x78c] sm:$0xff]
    %v427 = vld [vmem:[#allocation5 + $0x794] sm:$0xf]
    %v428 = vld [vmem:[#allocation5 + $0x798] sm:$0xff]
    %v429 = vld [vmem:[#allocation5 + $0x7a0] sm:$0xff]
    %v430 = vld [vmem:[#allocation5 + $0x7a8] sm:$0xff]
    %v431 = vld [vmem:[#allocation5 + $0x7b0] sm:$0xff]
    %v432 = vld [vmem:[#allocation5 + $0x7b8] sm:$0xf]
    %v433 = vld [vmem:[#allocation5 + $0x7bc] sm:$0xff]
    %v434 = vld [vmem:[#allocation5 + $0x7c4] sm:$0xff]
    %v435 = vld [vmem:[#allocation5 + $0x7cc] sm:$0xff]
    %v436 = vld [vmem:[#allocation5 + $0x7d4] sm:$0xff]
    %v437 = vld [vmem:[#allocation5 + $0x7dc] sm:$0xf]
    %v438 = vld [vmem:[#allocation5 + $0x7e0] sm:$0xff]
    %v439 = vld [vmem:[#allocation5 + $0x7e8] sm:$0xff]
    %v440 = vld [vmem:[#allocation5 + $0x7f0] sm:$0xff]
    %v441 = vld [vmem:[#allocation5 + $0x7f8] sm:$0xff]
    %v442 = vld [vmem:[#allocation5 + $0x800] sm:$0xf]
    %v443 = vld [vmem:[#allocation5 + $0x804] sm:$0xff]
    %v444 = vld [vmem:[#allocation5 + $0x80c] sm:$0xff]
    %v445 = vld [vmem:[#allocation5 + $0x814] sm:$0xff]
    %v446 = vld [vmem:[#allocation5 + $0x81c] sm:$0xff]
    %v447 = vld [vmem:[#allocation5 + $0x824] sm:$0xf]
    %v448 = vld [vmem:[#allocation5 + $0x828] sm:$0xff]
    %v449 = vld [vmem:[#allocation5 + $0x830] sm:$0xff]
    %v450 = vld [vmem:[#allocation5 + $0x838] sm:$0xff]
    %v451 = vld [vmem:[#allocation5 + $0x840] sm:$0xff]
    %v452 = vld [vmem:[#allocation5 + $0x848] sm:$0xf]
    %v453 = vld [vmem:[#allocation5 + $0x84c] sm:$0xff]
    %v454 = vld [vmem:[#allocation5 + $0x854] sm:$0xff]
    %v455 = vld [vmem:[#allocation5 + $0x85c] sm:$0xff]
    %v456 = vld [vmem:[#allocation5 + $0x864] sm:$0xff]
    %v457 = vld [vmem:[#allocation5 + $0x86c] sm:$0xf]
    %v458 = vld [vmem:[#allocation5 + $0x870] sm:$0xff]
    %v459 = vld [vmem:[#allocation5 + $0x878] sm:$0xff]
    %v460 = vld [vmem:[#allocation5 + $0x880] sm:$0xff]
    %v461 = vld [vmem:[#allocation5 + $0x888] sm:$0xff]
    %v462 = vld [vmem:[#allocation5 + $0x890] sm:$0xf]
    %v463 = vld [vmem:[#allocation5 + $0x894] sm:$0xff]
    %v464 = vld [vmem:[#allocation5 + $0x89c] sm:$0xff]
    %v465 = vld [vmem:[#allocation5 + $0x8a4] sm:$0xff]
    %v466 = vld [vmem:[#allocation5 + $0x8ac] sm:$0xff]
    %v467 = vld [vmem:[#allocation5 + $0x8b4] sm:$0xf]
    %v468 = vld [vmem:[#allocation5 + $0x8b8] sm:$0xff]
    %v469 = vld [vmem:[#allocation5 + $0x8c0] sm:$0xff]
    %v470 = vld [vmem:[#allocation5 + $0x8c8] sm:$0xff]
    %v471 = vld [vmem:[#allocation5 + $0x8d0] sm:$0xff]
    %v472 = vld [vmem:[#allocation5 + $0x8d8] sm:$0xf]
    %v473 = vld [vmem:[#allocation5 + $0x8dc] sm:$0xff]
    %v474 = vld [vmem:[#allocation5 + $0x8e4] sm:$0xff]
    %v475 = vld [vmem:[#allocation5 + $0x8ec] sm:$0xff]
    %v476 = vld [vmem:[#allocation5 + $0x8f4] sm:$0xff]
    %v477 = vld [vmem:[#allocation5 + $0x8fc] sm:$0xf]
    %v486 = vunpack.c.l.b16 %v150
    %v487 = vunpack.c.l.b16 %v151
    %v488 = vunpack.c.l.b16 %v152
    %v489 = vunpack.c.l.b16 %v153
    %v490 = vunpack.c.l.b16 %v154
    %v491 = vunpack.c.l.b16 %v155
    %v492 = vunpack.c.l.b16 %v156
    %v493 = vunpack.c.l.b16 %v157
    %vm494 = vcmask 1041409
    %v495 = vsel %vm494, %v490, %v486
    %v496 = vsel %vm494, %v491, %v487
    %v497 = vsel %vm494, %v492, %v488
    %v498 = vsel %vm494, %v493, %v489
    %v499 = vpack.c.b16 %v495, %v495
    %v500 = vpack.c.b16 %v496, %v496
    %v501 = vpack.c.b16 %v497, %v497
    %v502 = vpack.c.b16 %v498, %v498
    %v827 = vunpack.c.l.b16 %v158
    %v828 = vunpack.c.h.b16 %v158
    %v829 = vunpack.c.l.b16 %v159
    %v830 = vunpack.c.h.b16 %v159
    %v831 = vunpack.c.l.b16 %v160
    %v832 = vunpack.c.h.b16 %v160
    %v833 = vunpack.c.l.b16 %v161
    %v834 = vunpack.c.h.b16 %v161
    %v835 = vunpack.c.l.b16 %v162
    %v836 = vunpack.c.l.b16 %v163
    %v837 = vunpack.c.h.b16 %v163
    %v838 = vunpack.c.l.b16 %v164
    %v839 = vunpack.c.h.b16 %v164
    %v840 = vunpack.c.l.b16 %v165
    %v841 = vunpack.c.h.b16 %v165
    %v842 = vunpack.c.l.b16 %v166
    %v843 = vunpack.c.h.b16 %v166
    %v844 = vunpack.c.l.b16 %v167
    %v845 = vunpack.c.l.b16 %v168
    %v846 = vunpack.c.h.b16 %v168
    %v847 = vunpack.c.l.b16 %v169
    %v848 = vunpack.c.h.b16 %v169
    %v849 = vunpack.c.l.b16 %v170
    %v850 = vunpack.c.h.b16 %v170
    %v851 = vunpack.c.l.b16 %v171
    %v852 = vunpack.c.h.b16 %v171
    %v853 = vunpack.c.l.b16 %v172
    %v854 = vunpack.c.l.b16 %v173
    %v855 = vunpack.c.h.b16 %v173
    %v856 = vunpack.c.l.b16 %v174
    %v857 = vunpack.c.h.b16 %v174
    %v858 = vunpack.c.l.b16 %v175
    %v859 = vunpack.c.h.b16 %v175
    %v860 = vunpack.c.l.b16 %v176
    %v861 = vunpack.c.h.b16 %v176
    %v862 = vunpack.c.l.b16 %v177
    %v863 = vunpack.c.l.b16 %v178
    %v864 = vunpack.c.h.b16 %v178
    %v865 = vunpack.c.l.b16 %v179
    %v866 = vunpack.c.h.b16 %v179
    %v867 = vunpack.c.l.b16 %v180
    %v868 = vunpack.c.h.b16 %v180
    %v869 = vunpack.c.l.b16 %v181
    %v870 = vunpack.c.h.b16 %v181
    %v871 = vunpack.c.l.b16 %v182
    %v872 = vunpack.c.l.b16 %v183
    %v873 = vunpack.c.h.b16 %v183
    %v874 = vunpack.c.l.b16 %v184
    %v875 = vunpack.c.h.b16 %v184
    %v876 = vunpack.c.l.b16 %v185
    %v877 = vunpack.c.h.b16 %v185
    %v878 = vunpack.c.l.b16 %v186
    %v879 = vunpack.c.h.b16 %v186
    %v880 = vunpack.c.l.b16 %v187
    %v881 = vunpack.c.l.b16 %v188
    %v882 = vunpack.c.h.b16 %v188
    %v883 = vunpack.c.l.b16 %v189
    %v884 = vunpack.c.h.b16 %v189
    %v885 = vunpack.c.l.b16 %v190
    %v886 = vunpack.c.h.b16 %v190
    %v887 = vunpack.c.l.b16 %v191
    %v888 = vunpack.c.h.b16 %v191
    %v889 = vunpack.c.l.b16 %v192
    %v890 = vunpack.c.l.b16 %v193
    %v891 = vunpack.c.h.b16 %v193
    %v892 = vunpack.c.l.b16 %v194
    %v893 = vunpack.c.h.b16 %v194
    %v894 = vunpack.c.l.b16 %v195
    %v895 = vunpack.c.h.b16 %v195
    %v896 = vunpack.c.l.b16 %v196
    %v897 = vunpack.c.h.b16 %v196
    %v898 = vunpack.c.l.b16 %v197
    %v899 = vunpack.c.l.b16 %v198
    %v900 = vunpack.c.h.b16 %v198
    %v901 = vunpack.c.l.b16 %v199
    %v902 = vunpack.c.h.b16 %v199
    %v903 = vunpack.c.l.b16 %v200
    %v904 = vunpack.c.h.b16 %v200
    %v905 = vunpack.c.l.b16 %v201
    %v906 = vunpack.c.h.b16 %v201
    %v907 = vunpack.c.l.b16 %v202
    %v908 = vunpack.c.l.b16 %v203
    %v909 = vunpack.c.h.b16 %v203
    %v910 = vunpack.c.l.b16 %v204
    %v911 = vunpack.c.h.b16 %v204
    %v912 = vunpack.c.l.b16 %v205
    %v913 = vunpack.c.h.b16 %v205
    %v914 = vunpack.c.l.b16 %v206
    %v915 = vunpack.c.h.b16 %v206
    %v916 = vunpack.c.l.b16 %v207
    %v917 = vunpack.c.l.b16 %v208
    %v918 = vunpack.c.h.b16 %v208
    %v919 = vunpack.c.l.b16 %v209
    %v920 = vunpack.c.h.b16 %v209
    %v921 = vunpack.c.l.b16 %v210
    %v922 = vunpack.c.h.b16 %v210
    %v923 = vunpack.c.l.b16 %v211
    %v924 = vunpack.c.h.b16 %v211
    %v925 = vunpack.c.l.b16 %v212
    %v926 = vunpack.c.l.b16 %v213
    %v927 = vunpack.c.h.b16 %v213
    %v928 = vunpack.c.l.b16 %v214
    %v929 = vunpack.c.h.b16 %v214
    %v930 = vunpack.c.l.b16 %v215
    %v931 = vunpack.c.h.b16 %v215
    %v932 = vunpack.c.l.b16 %v216
    %v933 = vunpack.c.h.b16 %v216
    %v934 = vunpack.c.l.b16 %v217
    %v935 = vunpack.c.l.b16 %v218
    %v936 = vunpack.c.h.b16 %v218
    %v937 = vunpack.c.l.b16 %v219
    %v938 = vunpack.c.h.b16 %v219
    %v939 = vunpack.c.l.b16 %v220
    %v940 = vunpack.c.h.b16 %v220
    %v941 = vunpack.c.l.b16 %v221
    %v942 = vunpack.c.h.b16 %v221
    %v943 = vunpack.c.l.b16 %v222
    %v944 = vunpack.c.l.b16 %v223
    %v945 = vunpack.c.h.b16 %v223
    %v946 = vunpack.c.l.b16 %v224
    %v947 = vunpack.c.h.b16 %v224
    %v948 = vunpack.c.l.b16 %v225
    %v949 = vunpack.c.h.b16 %v225
    %v950 = vunpack.c.l.b16 %v226
    %v951 = vunpack.c.h.b16 %v226
    %v952 = vunpack.c.l.b16 %v227
    %v953 = vunpack.c.l.b16 %v228
    %v954 = vunpack.c.h.b16 %v228
    %v955 = vunpack.c.l.b16 %v229
    %v956 = vunpack.c.h.b16 %v229
    %v957 = vunpack.c.l.b16 %v230
    %v958 = vunpack.c.h.b16 %v230
    %v959 = vunpack.c.l.b16 %v231
    %v960 = vunpack.c.h.b16 %v231
    %v961 = vunpack.c.l.b16 %v232
    %v962 = vunpack.c.l.b16 %v233
    %v963 = vunpack.c.h.b16 %v233
    %v964 = vunpack.c.l.b16 %v234
    %v965 = vunpack.c.h.b16 %v234
    %v966 = vunpack.c.l.b16 %v235
    %v967 = vunpack.c.h.b16 %v235
    %v968 = vunpack.c.l.b16 %v236
    %v969 = vunpack.c.h.b16 %v236
    %v970 = vunpack.c.l.b16 %v237
    %v971 = vunpack.c.l.b16 %v238
    %v972 = vunpack.c.h.b16 %v238
    %v973 = vunpack.c.l.b16 %v239
    %v974 = vunpack.c.h.b16 %v239
    %v975 = vunpack.c.l.b16 %v240
    %v976 = vunpack.c.h.b16 %v240
    %v977 = vunpack.c.l.b16 %v241
    %v978 = vunpack.c.h.b16 %v241
    %v979 = vunpack.c.l.b16 %v242
    %v980 = vunpack.c.l.b16 %v243
    %v981 = vunpack.c.h.b16 %v243
    %v982 = vunpack.c.l.b16 %v244
    %v983 = vunpack.c.h.b16 %v244
    %v984 = vunpack.c.l.b16 %v245
    %v985 = vunpack.c.h.b16 %v245
    %v986 = vunpack.c.l.b16 %v246
    %v987 = vunpack.c.h.b16 %v246
    %v988 = vunpack.c.l.b16 %v247
    %v989 = vunpack.c.l.b16 %v248
    %v990 = vunpack.c.h.b16 %v248
    %v991 = vunpack.c.l.b16 %v249
    %v992 = vunpack.c.h.b16 %v249
    %v993 = vunpack.c.l.b16 %v250
    %v994 = vunpack.c.h.b16 %v250
    %v995 = vunpack.c.l.b16 %v251
    %v996 = vunpack.c.h.b16 %v251
    %v997 = vunpack.c.l.b16 %v252
    %v998 = vunpack.c.l.b16 %v253
    %v999 = vunpack.c.h.b16 %v253
    %v1000 = vunpack.c.l.b16 %v254
    %v1001 = vunpack.c.h.b16 %v254
    %v1002 = vunpack.c.l.b16 %v255
    %v1003 = vunpack.c.h.b16 %v255
    %v1004 = vunpack.c.l.b16 %v256
    %v1005 = vunpack.c.h.b16 %v256
    %v1006 = vunpack.c.l.b16 %v257
    %v1007 = vunpack.c.l.b16 %v258
    %v1008 = vunpack.c.h.b16 %v258
    %v1009 = vunpack.c.l.b16 %v259
    %v1010 = vunpack.c.h.b16 %v259
    %v1011 = vunpack.c.l.b16 %v260
    %v1012 = vunpack.c.h.b16 %v260
    %v1013 = vunpack.c.l.b16 %v261
    %v1014 = vunpack.c.h.b16 %v261
    %v1015 = vunpack.c.l.b16 %v262
    %v1016 = vunpack.c.l.b16 %v263
    %v1017 = vunpack.c.h.b16 %v263
    %v1018 = vunpack.c.l.b16 %v264
    %v1019 = vunpack.c.h.b16 %v264
    %v1020 = vunpack.c.l.b16 %v265
    %v1021 = vunpack.c.h.b16 %v265
    %v1022 = vunpack.c.l.b16 %v266
    %v1023 = vunpack.c.h.b16 %v266
    %v1024 = vunpack.c.l.b16 %v267
    %v1025 = vunpack.c.l.b16 %v268
    %v1026 = vunpack.c.h.b16 %v268
    %v1027 = vunpack.c.l.b16 %v269
    %v1028 = vunpack.c.h.b16 %v269
    %v1029 = vunpack.c.l.b16 %v270
    %v1030 = vunpack.c.h.b16 %v270
    %v1031 = vunpack.c.l.b16 %v271
    %v1032 = vunpack.c.h.b16 %v271
    %v1033 = vunpack.c.l.b16 %v272
    %v1034 = vunpack.c.l.b16 %v273
    %v1035 = vunpack.c.h.b16 %v273
    %v1036 = vunpack.c.l.b16 %v274
    %v1037 = vunpack.c.h.b16 %v274
    %v1038 = vunpack.c.l.b16 %v275
    %v1039 = vunpack.c.h.b16 %v275
    %v1040 = vunpack.c.l.b16 %v276
    %v1041 = vunpack.c.h.b16 %v276
    %v1042 = vunpack.c.l.b16 %v277
    %v1043 = vunpack.c.l.b16 %v278
    %v1044 = vunpack.c.h.b16 %v278
    %v1045 = vunpack.c.l.b16 %v279
    %v1046 = vunpack.c.h.b16 %v279
    %v1047 = vunpack.c.l.b16 %v280
    %v1048 = vunpack.c.h.b16 %v280
    %v1049 = vunpack.c.l.b16 %v281
    %v1050 = vunpack.c.h.b16 %v281
    %v1051 = vunpack.c.l.b16 %v282
    %v1052 = vunpack.c.l.b16 %v283
    %v1053 = vunpack.c.h.b16 %v283
    %v1054 = vunpack.c.l.b16 %v284
    %v1055 = vunpack.c.h.b16 %v284
    %v1056 = vunpack.c.l.b16 %v285
    %v1057 = vunpack.c.h.b16 %v285
    %v1058 = vunpack.c.l.b16 %v286
    %v1059 = vunpack.c.h.b16 %v286
    %v1060 = vunpack.c.l.b16 %v287
    %v1061 = vunpack.c.l.b16 %v288
    %v1062 = vunpack.c.h.b16 %v288
    %v1063 = vunpack.c.l.b16 %v289
    %v1064 = vunpack.c.h.b16 %v289
    %v1065 = vunpack.c.l.b16 %v290
    %v1066 = vunpack.c.h.b16 %v290
    %v1067 = vunpack.c.l.b16 %v291
    %v1068 = vunpack.c.h.b16 %v291
    %v1069 = vunpack.c.l.b16 %v292
    %v1070 = vunpack.c.l.b16 %v293
    %v1071 = vunpack.c.h.b16 %v293
    %v1072 = vunpack.c.l.b16 %v294
    %v1073 = vunpack.c.h.b16 %v294
    %v1074 = vunpack.c.l.b16 %v295
    %v1075 = vunpack.c.h.b16 %v295
    %v1076 = vunpack.c.l.b16 %v296
    %v1077 = vunpack.c.h.b16 %v296
    %v1078 = vunpack.c.l.b16 %v297
    %v1079 = vunpack.c.l.b16 %v298
    %v1080 = vunpack.c.h.b16 %v298
    %v1081 = vunpack.c.l.b16 %v299
    %v1082 = vunpack.c.h.b16 %v299
    %v1083 = vunpack.c.l.b16 %v300
    %v1084 = vunpack.c.h.b16 %v300
    %v1085 = vunpack.c.l.b16 %v301
    %v1086 = vunpack.c.h.b16 %v301
    %v1087 = vunpack.c.l.b16 %v302
    %v1088 = vunpack.c.l.b16 %v303
    %v1089 = vunpack.c.h.b16 %v303
    %v1090 = vunpack.c.l.b16 %v304
    %v1091 = vunpack.c.h.b16 %v304
    %v1092 = vunpack.c.l.b16 %v305
    %v1093 = vunpack.c.h.b16 %v305
    %v1094 = vunpack.c.l.b16 %v306
    %v1095 = vunpack.c.h.b16 %v306
    %v1096 = vunpack.c.l.b16 %v307
    %v1097 = vunpack.c.l.b16 %v308
    %v1098 = vunpack.c.h.b16 %v308
    %v1099 = vunpack.c.l.b16 %v309
    %v1100 = vunpack.c.h.b16 %v309
    %v1101 = vunpack.c.l.b16 %v310
    %v1102 = vunpack.c.h.b16 %v310
    %v1103 = vunpack.c.l.b16 %v311
    %v1104 = vunpack.c.h.b16 %v311
    %v1105 = vunpack.c.l.b16 %v312
    %v1106 = vunpack.c.l.b16 %v313
    %v1107 = vunpack.c.h.b16 %v313
    %v1108 = vunpack.c.l.b16 %v314
    %v1109 = vunpack.c.h.b16 %v314
    %v1110 = vunpack.c.l.b16 %v315
    %v1111 = vunpack.c.h.b16 %v315
    %v1112 = vunpack.c.l.b16 %v316
    %v1113 = vunpack.c.h.b16 %v316
    %v1114 = vunpack.c.l.b16 %v317
    %v1115 = vunpack.c.l.b16 %v318
    %v1116 = vunpack.c.h.b16 %v318
    %v1117 = vunpack.c.l.b16 %v319
    %v1118 = vunpack.c.h.b16 %v319
    %v1119 = vunpack.c.l.b16 %v320
    %v1120 = vunpack.c.h.b16 %v320
    %v1121 = vunpack.c.l.b16 %v321
    %v1122 = vunpack.c.h.b16 %v321
    %v1123 = vunpack.c.l.b16 %v322
    %v1124 = vunpack.c.l.b16 %v323
    %v1125 = vunpack.c.h.b16 %v323
    %v1126 = vunpack.c.l.b16 %v324
    %v1127 = vunpack.c.h.b16 %v324
    %v1128 = vunpack.c.l.b16 %v325
    %v1129 = vunpack.c.h.b16 %v325
    %v1130 = vunpack.c.l.b16 %v326
    %v1131 = vunpack.c.h.b16 %v326
    %v1132 = vunpack.c.l.b16 %v327
    %v1133 = vunpack.c.l.b16 %v328
    %v1134 = vunpack.c.h.b16 %v328
    %v1135 = vunpack.c.l.b16 %v329
    %v1136 = vunpack.c.h.b16 %v329
    %v1137 = vunpack.c.l.b16 %v330
    %v1138 = vunpack.c.h.b16 %v330
    %v1139 = vunpack.c.l.b16 %v331
    %v1140 = vunpack.c.h.b16 %v331
    %v1141 = vunpack.c.l.b16 %v332
    %v1142 = vunpack.c.l.b16 %v333
    %v1143 = vunpack.c.h.b16 %v333
    %v1144 = vunpack.c.l.b16 %v334
    %v1145 = vunpack.c.h.b16 %v334
    %v1146 = vunpack.c.l.b16 %v335
    %v1147 = vunpack.c.h.b16 %v335
    %v1148 = vunpack.c.l.b16 %v336
    %v1149 = vunpack.c.h.b16 %v336
    %v1150 = vunpack.c.l.b16 %v337
    %v1151 = vunpack.c.l.b16 %v338
    %v1152 = vunpack.c.h.b16 %v338
    %v1153 = vunpack.c.l.b16 %v339
    %v1154 = vunpack.c.h.b16 %v339
    %v1155 = vunpack.c.l.b16 %v340
    %v1156 = vunpack.c.h.b16 %v340
    %v1157 = vunpack.c.l.b16 %v341
    %v1158 = vunpack.c.h.b16 %v341
    %v1159 = vunpack.c.l.b16 %v342
    %v1160 = vunpack.c.l.b16 %v343
    %v1161 = vunpack.c.h.b16 %v343
    %v1162 = vunpack.c.l.b16 %v344
    %v1163 = vunpack.c.h.b16 %v344
    %v1164 = vunpack.c.l.b16 %v345
    %v1165 = vunpack.c.h.b16 %v345
    %v1166 = vunpack.c.l.b16 %v346
    %v1167 = vunpack.c.h.b16 %v346
    %v1168 = vunpack.c.l.b16 %v347
    %v1169 = vunpack.c.l.b16 %v348
    %v1170 = vunpack.c.h.b16 %v348
    %v1171 = vunpack.c.l.b16 %v349
    %v1172 = vunpack.c.h.b16 %v349
    %v1173 = vunpack.c.l.b16 %v350
    %v1174 = vunpack.c.h.b16 %v350
    %v1175 = vunpack.c.l.b16 %v351
    %v1176 = vunpack.c.h.b16 %v351
    %v1177 = vunpack.c.l.b16 %v352
    %v1178 = vunpack.c.l.b16 %v353
    %v1179 = vunpack.c.h.b16 %v353
    %v1180 = vunpack.c.l.b16 %v354
    %v1181 = vunpack.c.h.b16 %v354
    %v1182 = vunpack.c.l.b16 %v355
    %v1183 = vunpack.c.h.b16 %v355
    %v1184 = vunpack.c.l.b16 %v356
    %v1185 = vunpack.c.h.b16 %v356
    %v1186 = vunpack.c.l.b16 %v357
    %v1187 = vunpack.c.l.b16 %v358
    %v1188 = vunpack.c.h.b16 %v358
    %v1189 = vunpack.c.l.b16 %v359
    %v1190 = vunpack.c.h.b16 %v359
    %v1191 = vunpack.c.l.b16 %v360
    %v1192 = vunpack.c.h.b16 %v360
    %v1193 = vunpack.c.l.b16 %v361
    %v1194 = vunpack.c.h.b16 %v361
    %v1195 = vunpack.c.l.b16 %v362
    %v1196 = vunpack.c.l.b16 %v363
    %v1197 = vunpack.c.h.b16 %v363
    %v1198 = vunpack.c.l.b16 %v364
    %v1199 = vunpack.c.h.b16 %v364
    %v1200 = vunpack.c.l.b16 %v365
    %v1201 = vunpack.c.h.b16 %v365
    %v1202 = vunpack.c.l.b16 %v366
    %v1203 = vunpack.c.h.b16 %v366
    %v1204 = vunpack.c.l.b16 %v367
    %v1205 = vunpack.c.l.b16 %v368
    %v1206 = vunpack.c.h.b16 %v368
    %v1207 = vunpack.c.l.b16 %v369
    %v1208 = vunpack.c.h.b16 %v369
    %v1209 = vunpack.c.l.b16 %v370
    %v1210 = vunpack.c.h.b16 %v370
    %v1211 = vunpack.c.l.b16 %v371
    %v1212 = vunpack.c.h.b16 %v371
    %v1213 = vunpack.c.l.b16 %v372
    %v1214 = vunpack.c.l.b16 %v373
    %v1215 = vunpack.c.h.b16 %v373
    %v1216 = vunpack.c.l.b16 %v374
    %v1217 = vunpack.c.h.b16 %v374
    %v1218 = vunpack.c.l.b16 %v375
    %v1219 = vunpack.c.h.b16 %v375
    %v1220 = vunpack.c.l.b16 %v376
    %v1221 = vunpack.c.h.b16 %v376
    %v1222 = vunpack.c.l.b16 %v377
    %v1223 = vunpack.c.l.b16 %v378
    %v1224 = vunpack.c.h.b16 %v378
    %v1225 = vunpack.c.l.b16 %v379
    %v1226 = vunpack.c.h.b16 %v379
    %v1227 = vunpack.c.l.b16 %v380
    %v1228 = vunpack.c.h.b16 %v380
    %v1229 = vunpack.c.l.b16 %v381
    %v1230 = vunpack.c.h.b16 %v381
    %v1231 = vunpack.c.l.b16 %v382
    %v1232 = vunpack.c.l.b16 %v383
    %v1233 = vunpack.c.h.b16 %v383
    %v1234 = vunpack.c.l.b16 %v384
    %v1235 = vunpack.c.h.b16 %v384
    %v1236 = vunpack.c.l.b16 %v385
    %v1237 = vunpack.c.h.b16 %v385
    %v1238 = vunpack.c.l.b16 %v386
    %v1239 = vunpack.c.h.b16 %v386
    %v1240 = vunpack.c.l.b16 %v387
    %v1241 = vunpack.c.l.b16 %v388
    %v1242 = vunpack.c.h.b16 %v388
    %v1243 = vunpack.c.l.b16 %v389
    %v1244 = vunpack.c.h.b16 %v389
    %v1245 = vunpack.c.l.b16 %v390
    %v1246 = vunpack.c.h.b16 %v390
    %v1247 = vunpack.c.l.b16 %v391
    %v1248 = vunpack.c.h.b16 %v391
    %v1249 = vunpack.c.l.b16 %v392
    %v1250 = vunpack.c.l.b16 %v393
    %v1251 = vunpack.c.h.b16 %v393
    %v1252 = vunpack.c.l.b16 %v394
    %v1253 = vunpack.c.h.b16 %v394
    %v1254 = vunpack.c.l.b16 %v395
    %v1255 = vunpack.c.h.b16 %v395
    %v1256 = vunpack.c.l.b16 %v396
    %v1257 = vunpack.c.h.b16 %v396
    %v1258 = vunpack.c.l.b16 %v397
    %v1259 = vunpack.c.l.b16 %v398
    %v1260 = vunpack.c.h.b16 %v398
    %v1261 = vunpack.c.l.b16 %v399
    %v1262 = vunpack.c.h.b16 %v399
    %v1263 = vunpack.c.l.b16 %v400
    %v1264 = vunpack.c.h.b16 %v400
    %v1265 = vunpack.c.l.b16 %v401
    %v1266 = vunpack.c.h.b16 %v401
    %v1267 = vunpack.c.l.b16 %v402
    %v1268 = vunpack.c.l.b16 %v403
    %v1269 = vunpack.c.h.b16 %v403
    %v1270 = vunpack.c.l.b16 %v404
    %v1271 = vunpack.c.h.b16 %v404
    %v1272 = vunpack.c.l.b16 %v405
    %v1273 = vunpack.c.h.b16 %v405
    %v1274 = vunpack.c.l.b16 %v406
    %v1275 = vunpack.c.h.b16 %v406
    %v1276 = vunpack.c.l.b16 %v407
    %v1277 = vunpack.c.l.b16 %v408
    %v1278 = vunpack.c.h.b16 %v408
    %v1279 = vunpack.c.l.b16 %v409
    %v1280 = vunpack.c.h.b16 %v409
    %v1281 = vunpack.c.l.b16 %v410
    %v1282 = vunpack.c.h.b16 %v410
    %v1283 = vunpack.c.l.b16 %v411
    %v1284 = vunpack.c.h.b16 %v411
    %v1285 = vunpack.c.l.b16 %v412
    %v1286 = vunpack.c.l.b16 %v413
    %v1287 = vunpack.c.h.b16 %v413
    %v1288 = vunpack.c.l.b16 %v414
    %v1289 = vunpack.c.h.b16 %v414
    %v1290 = vunpack.c.l.b16 %v415
    %v1291 = vunpack.c.h.b16 %v415
    %v1292 = vunpack.c.l.b16 %v416
    %v1293 = vunpack.c.h.b16 %v416
    %v1294 = vunpack.c.l.b16 %v417
    %v1295 = vunpack.c.l.b16 %v418
    %v1296 = vunpack.c.h.b16 %v418
    %v1297 = vunpack.c.l.b16 %v419
    %v1298 = vunpack.c.h.b16 %v419
    %v1299 = vunpack.c.l.b16 %v420
    %v1300 = vunpack.c.h.b16 %v420
    %v1301 = vunpack.c.l.b16 %v421
    %v1302 = vunpack.c.h.b16 %v421
    %v1303 = vunpack.c.l.b16 %v422
    %v1304 = vunpack.c.l.b16 %v423
    %v1305 = vunpack.c.h.b16 %v423
    %v1306 = vunpack.c.l.b16 %v424
    %v1307 = vunpack.c.h.b16 %v424
    %v1308 = vunpack.c.l.b16 %v425
    %v1309 = vunpack.c.h.b16 %v425
    %v1310 = vunpack.c.l.b16 %v426
    %v1311 = vunpack.c.h.b16 %v426
    %v1312 = vunpack.c.l.b16 %v427
    %v1313 = vunpack.c.l.b16 %v428
    %v1314 = vunpack.c.h.b16 %v428
    %v1315 = vunpack.c.l.b16 %v429
    %v1316 = vunpack.c.h.b16 %v429
    %v1317 = vunpack.c.l.b16 %v430
    %v1318 = vunpack.c.h.b16 %v430
    %v1319 = vunpack.c.l.b16 %v431
    %v1320 = vunpack.c.h.b16 %v431
    %v1321 = vunpack.c.l.b16 %v432
    %v1322 = vunpack.c.l.b16 %v433
    %v1323 = vunpack.c.h.b16 %v433
    %v1324 = vunpack.c.l.b16 %v434
    %v1325 = vunpack.c.h.b16 %v434
    %v1326 = vunpack.c.l.b16 %v435
    %v1327 = vunpack.c.h.b16 %v435
    %v1328 = vunpack.c.l.b16 %v436
    %v1329 = vunpack.c.h.b16 %v436
    %v1330 = vunpack.c.l.b16 %v437
    %v1331 = vunpack.c.l.b16 %v438
    %v1332 = vunpack.c.h.b16 %v438
    %v1333 = vunpack.c.l.b16 %v439
    %v1334 = vunpack.c.h.b16 %v439
    %v1335 = vunpack.c.l.b16 %v440
    %v1336 = vunpack.c.h.b16 %v440
    %v1337 = vunpack.c.l.b16 %v441
    %v1338 = vunpack.c.h.b16 %v441
    %v1339 = vunpack.c.l.b16 %v442
    %v1340 = vunpack.c.l.b16 %v443
    %v1341 = vunpack.c.h.b16 %v443
    %v1342 = vunpack.c.l.b16 %v444
    %v1343 = vunpack.c.h.b16 %v444
    %v1344 = vunpack.c.l.b16 %v445
    %v1345 = vunpack.c.h.b16 %v445
    %v1346 = vunpack.c.l.b16 %v446
    %v1347 = vunpack.c.h.b16 %v446
    %v1348 = vunpack.c.l.b16 %v447
    %v1349 = vunpack.c.l.b16 %v448
    %v1350 = vunpack.c.h.b16 %v448
    %v1351 = vunpack.c.l.b16 %v449
    %v1352 = vunpack.c.h.b16 %v449
    %v1353 = vunpack.c.l.b16 %v450
    %v1354 = vunpack.c.h.b16 %v450
    %v1355 = vunpack.c.l.b16 %v451
    %v1356 = vunpack.c.h.b16 %v451
    %v1357 = vunpack.c.l.b16 %v452
    %v1358 = vunpack.c.l.b16 %v453
    %v1359 = vunpack.c.h.b16 %v453
    %v1360 = vunpack.c.l.b16 %v454
    %v1361 = vunpack.c.h.b16 %v454
    %v1362 = vunpack.c.l.b16 %v455
    %v1363 = vunpack.c.h.b16 %v455
    %v1364 = vunpack.c.l.b16 %v456
    %v1365 = vunpack.c.h.b16 %v456
    %v1366 = vunpack.c.l.b16 %v457
    %v1367 = vunpack.c.l.b16 %v458
    %v1368 = vunpack.c.h.b16 %v458
    %v1369 = vunpack.c.l.b16 %v459
    %v1370 = vunpack.c.h.b16 %v459
    %v1371 = vunpack.c.l.b16 %v460
    %v1372 = vunpack.c.h.b16 %v460
    %v1373 = vunpack.c.l.b16 %v461
    %v1374 = vunpack.c.h.b16 %v461
    %v1375 = vunpack.c.l.b16 %v462
    %v1376 = vunpack.c.l.b16 %v463
    %v1377 = vunpack.c.h.b16 %v463
    %v1378 = vunpack.c.l.b16 %v464
    %v1379 = vunpack.c.h.b16 %v464
    %v1380 = vunpack.c.l.b16 %v465
    %v1381 = vunpack.c.h.b16 %v465
    %v1382 = vunpack.c.l.b16 %v466
    %v1383 = vunpack.c.h.b16 %v466
    %v1384 = vunpack.c.l.b16 %v467
    %v1385 = vunpack.c.l.b16 %v468
    %v1386 = vunpack.c.h.b16 %v468
    %v1387 = vunpack.c.l.b16 %v469
    %v1388 = vunpack.c.h.b16 %v469
    %v1389 = vunpack.c.l.b16 %v470
    %v1390 = vunpack.c.h.b16 %v470
    %v1391 = vunpack.c.l.b16 %v471
    %v1392 = vunpack.c.h.b16 %v471
    %v1393 = vunpack.c.l.b16 %v472
    %v1394 = vunpack.c.l.b16 %v473
    %v1395 = vunpack.c.h.b16 %v473
    %v1396 = vunpack.c.l.b16 %v474
    %v1397 = vunpack.c.h.b16 %v474
    %v1398 = vunpack.c.l.b16 %v475
    %v1399 = vunpack.c.h.b16 %v475
    %v1400 = vunpack.c.l.b16 %v476
    %v1401 = vunpack.c.h.b16 %v476
    %v1402 = vunpack.c.l.b16 %v477
    %v1403 = vpack.c.b16 %v836, %v827
    %v1404 = vpack.c.b16 %v837, %v828
    %v1405 = vpack.c.b16 %v838, %v829
    %v1406 = vpack.c.b16 %v839, %v830
    %v1407 = vpack.c.b16 %v840, %v831
    %v1408 = vpack.c.b16 %v841, %v832
    %v1409 = vpack.c.b16 %v842, %v833
    %v1410 = vpack.c.b16 %v843, %v834
    %v1411 = vpack.c.b16 %v844, %v835
    %v1412 = vpack.c.b16 %v854, %v845
    %v1413 = vpack.c.b16 %v855, %v846
    %v1414 = vpack.c.b16 %v856, %v847
    %v1415 = vpack.c.b16 %v857, %v848
    %v1416 = vpack.c.b16 %v858, %v849
    %v1417 = vpack.c.b16 %v859, %v850
    %v1418 = vpack.c.b16 %v860, %v851
    %v1419 = vpack.c.b16 %v861, %v852
    %v1420 = vpack.c.b16 %v862, %v853
    %v1421 = vpack.c.b16 %v872, %v863
    %v1422 = vpack.c.b16 %v873, %v864
    %v1423 = vpack.c.b16 %v874, %v865
    %v1424 = vpack.c.b16 %v875, %v866
    %v1425 = vpack.c.b16 %v876, %v867
    %v1426 = vpack.c.b16 %v877, %v868
    %v1427 = vpack.c.b16 %v878, %v869
    %v1428 = vpack.c.b16 %v879, %v870
    %v1429 = vpack.c.b16 %v880, %v871
    %v1430 = vpack.c.b16 %v890, %v881
    %v1431 = vpack.c.b16 %v891, %v882
    %v1432 = vpack.c.b16 %v892, %v883
    %v1433 = vpack.c.b16 %v893, %v884
    %v1434 = vpack.c.b16 %v894, %v885
    %v1435 = vpack.c.b16 %v895, %v886
    %v1436 = vpack.c.b16 %v896, %v887
    %v1437 = vpack.c.b16 %v897, %v888
    %v1438 = vpack.c.b16 %v898, %v889
    %v1439 = vpack.c.b16 %v908, %v899
    %v1440 = vpack.c.b16 %v909, %v900
    %v1441 = vpack.c.b16 %v910, %v901
    %v1442 = vpack.c.b16 %v911, %v902
    %v1443 = vpack.c.b16 %v912, %v903
    %v1444 = vpack.c.b16 %v913, %v904
    %v1445 = vpack.c.b16 %v914, %v905
    %v1446 = vpack.c.b16 %v915, %v906
    %v1447 = vpack.c.b16 %v916, %v907
    %v1448 = vpack.c.b16 %v926, %v917
    %v1449 = vpack.c.b16 %v927, %v918
    %v1450 = vpack.c.b16 %v928, %v919
    %v1451 = vpack.c.b16 %v929, %v920
    %v1452 = vpack.c.b16 %v930, %v921
    %v1453 = vpack.c.b16 %v931, %v922
    %v1454 = vpack.c.b16 %v932, %v923
    %v1455 = vpack.c.b16 %v933, %v924
    %v1456 = vpack.c.b16 %v934, %v925
    %v1457 = vpack.c.b16 %v944, %v935
    %v1458 = vpack.c.b16 %v945, %v936
    %v1459 = vpack.c.b16 %v946, %v937
    %v1460 = vpack.c.b16 %v947, %v938
    %v1461 = vpack.c.b16 %v948, %v939
    %v1462 = vpack.c.b16 %v949, %v940
    %v1463 = vpack.c.b16 %v950, %v941
    %v1464 = vpack.c.b16 %v951, %v942
    %v1465 = vpack.c.b16 %v952, %v943
    %v1466 = vpack.c.b16 %v962, %v953
    %v1467 = vpack.c.b16 %v963, %v954
    %v1468 = vpack.c.b16 %v964, %v955
    %v1469 = vpack.c.b16 %v965, %v956
    %v1470 = vpack.c.b16 %v966, %v957
    %v1471 = vpack.c.b16 %v967, %v958
    %v1472 = vpack.c.b16 %v968, %v959
    %v1473 = vpack.c.b16 %v969, %v960
    %v1474 = vpack.c.b16 %v970, %v961
    %v1475 = vpack.c.b16 %v980, %v971
    %v1476 = vpack.c.b16 %v981, %v972
    %v1477 = vpack.c.b16 %v982, %v973
    %v1478 = vpack.c.b16 %v983, %v974
    %v1479 = vpack.c.b16 %v984, %v975
    %v1480 = vpack.c.b16 %v985, %v976
    %v1481 = vpack.c.b16 %v986, %v977
    %v1482 = vpack.c.b16 %v987, %v978
    %v1483 = vpack.c.b16 %v988, %v979
    %v1484 = vpack.c.b16 %v998, %v989
    %v1485 = vpack.c.b16 %v999, %v990
    %v1486 = vpack.c.b16 %v1000, %v991
    %v1487 = vpack.c.b16 %v1001, %v992
    %v1488 = vpack.c.b16 %v1002, %v993
    %v1489 = vpack.c.b16 %v1003, %v994
    %v1490 = vpack.c.b16 %v1004, %v995
    %v1491 = vpack.c.b16 %v1005, %v996
    %v1492 = vpack.c.b16 %v1006, %v997
    %v1493 = vpack.c.b16 %v1016, %v1007
    %v1494 = vpack.c.b16 %v1017, %v1008
    %v1495 = vpack.c.b16 %v1018, %v1009
    %v1496 = vpack.c.b16 %v1019, %v1010
    %v1497 = vpack.c.b16 %v1020, %v1011
    %v1498 = vpack.c.b16 %v1021, %v1012
    %v1499 = vpack.c.b16 %v1022, %v1013
    %v1500 = vpack.c.b16 %v1023, %v1014
    %v1501 = vpack.c.b16 %v1024, %v1015
    %v1502 = vpack.c.b16 %v1034, %v1025
    %v1503 = vpack.c.b16 %v1035, %v1026
    %v1504 = vpack.c.b16 %v1036, %v1027
    %v1505 = vpack.c.b16 %v1037, %v1028
    %v1506 = vpack.c.b16 %v1038, %v1029
    %v1507 = vpack.c.b16 %v1039, %v1030
    %v1508 = vpack.c.b16 %v1040, %v1031
    %v1509 = vpack.c.b16 %v1041, %v1032
    %v1510 = vpack.c.b16 %v1042, %v1033
    %v1511 = vpack.c.b16 %v1052, %v1043
    %v1512 = vpack.c.b16 %v1053, %v1044
    %v1513 = vpack.c.b16 %v1054, %v1045
    %v1514 = vpack.c.b16 %v1055, %v1046
    %v1515 = vpack.c.b16 %v1056, %v1047
    %v1516 = vpack.c.b16 %v1057, %v1048
    %v1517 = vpack.c.b16 %v1058, %v1049
    %v1518 = vpack.c.b16 %v1059, %v1050
    %v1519 = vpack.c.b16 %v1060, %v1051
    %v1520 = vpack.c.b16 %v1070, %v1061
    %v1521 = vpack.c.b16 %v1071, %v1062
    %v1522 = vpack.c.b16 %v1072, %v1063
    %v1523 = vpack.c.b16 %v1073, %v1064
    %v1524 = vpack.c.b16 %v1074, %v1065
    %v1525 = vpack.c.b16 %v1075, %v1066
    %v1526 = vpack.c.b16 %v1076, %v1067
    %v1527 = vpack.c.b16 %v1077, %v1068
    %v1528 = vpack.c.b16 %v1078, %v1069
    %v1529 = vpack.c.b16 %v1088, %v1079
    %v1530 = vpack.c.b16 %v1089, %v1080
    %v1531 = vpack.c.b16 %v1090, %v1081
    %v1532 = vpack.c.b16 %v1091, %v1082
    %v1533 = vpack.c.b16 %v1092, %v1083
    %v1534 = vpack.c.b16 %v1093, %v1084
    %v1535 = vpack.c.b16 %v1094, %v1085
    %v1536 = vpack.c.b16 %v1095, %v1086
    %v1537 = vpack.c.b16 %v1096, %v1087
    %v1538 = vpack.c.b16 %v1106, %v1097
    %v1539 = vpack.c.b16 %v1107, %v1098
    %v1540 = vpack.c.b16 %v1108, %v1099
    %v1541 = vpack.c.b16 %v1109, %v1100
    %v1542 = vpack.c.b16 %v1110, %v1101
    %v1543 = vpack.c.b16 %v1111, %v1102
    %v1544 = vpack.c.b16 %v1112, %v1103
    %v1545 = vpack.c.b16 %v1113, %v1104
    %v1546 = vpack.c.b16 %v1114, %v1105
    %v1547 = vpack.c.b16 %v1124, %v1115
    %v1548 = vpack.c.b16 %v1125, %v1116
    %v1549 = vpack.c.b16 %v1126, %v1117
    %v1550 = vpack.c.b16 %v1127, %v1118
    %v1551 = vpack.c.b16 %v1128, %v1119
    %v1552 = vpack.c.b16 %v1129, %v1120
    %v1553 = vpack.c.b16 %v1130, %v1121
    %v1554 = vpack.c.b16 %v1131, %v1122
    %v1555 = vpack.c.b16 %v1132, %v1123
    %v1556 = vpack.c.b16 %v1142, %v1133
    %v1557 = vpack.c.b16 %v1143, %v1134
    %v1558 = vpack.c.b16 %v1144, %v1135
    %v1559 = vpack.c.b16 %v1145, %v1136
    %v1560 = vpack.c.b16 %v1146, %v1137
    %v1561 = vpack.c.b16 %v1147, %v1138
    %v1562 = vpack.c.b16 %v1148, %v1139
    %v1563 = vpack.c.b16 %v1149, %v1140
    %v1564 = vpack.c.b16 %v1150, %v1141
    %v1565 = vpack.c.b16 %v1160, %v1151
    %v1566 = vpack.c.b16 %v1161, %v1152
    %v1567 = vpack.c.b16 %v1162, %v1153
    %v1568 = vpack.c.b16 %v1163, %v1154
    %v1569 = vpack.c.b16 %v1164, %v1155
    %v1570 = vpack.c.b16 %v1165, %v1156
    %v1571 = vpack.c.b16 %v1166, %v1157
    %v1572 = vpack.c.b16 %v1167, %v1158
    %v1573 = vpack.c.b16 %v1168, %v1159
    %v1574 = vpack.c.b16 %v1178, %v1169
    %v1575 = vpack.c.b16 %v1179, %v1170
    %v1576 = vpack.c.b16 %v1180, %v1171
    %v1577 = vpack.c.b16 %v1181, %v1172
    %v1578 = vpack.c.b16 %v1182, %v1173
    %v1579 = vpack.c.b16 %v1183, %v1174
    %v1580 = vpack.c.b16 %v1184, %v1175
    %v1581 = vpack.c.b16 %v1185, %v1176
    %v1582 = vpack.c.b16 %v1186, %v1177
    %v1583 = vpack.c.b16 %v1196, %v1187
    %v1584 = vpack.c.b16 %v1197, %v1188
    %v1585 = vpack.c.b16 %v1198, %v1189
    %v1586 = vpack.c.b16 %v1199, %v1190
    %v1587 = vpack.c.b16 %v1200, %v1191
    %v1588 = vpack.c.b16 %v1201, %v1192
    %v1589 = vpack.c.b16 %v1202, %v1193
    %v1590 = vpack.c.b16 %v1203, %v1194
    %v1591 = vpack.c.b16 %v1204, %v1195
    %v1592 = vpack.c.b16 %v1214, %v1205
    %v1593 = vpack.c.b16 %v1215, %v1206
    %v1594 = vpack.c.b16 %v1216, %v1207
    %v1595 = vpack.c.b16 %v1217, %v1208
    %v1596 = vpack.c.b16 %v1218, %v1209
    %v1597 = vpack.c.b16 %v1219, %v1210
    %v1598 = vpack.c.b16 %v1220, %v1211
    %v1599 = vpack.c.b16 %v1221, %v1212
    %v1600 = vpack.c.b16 %v1222, %v1213
    %v1601 = vpack.c.b16 %v1232, %v1223
    %v1602 = vpack.c.b16 %v1233, %v1224
    %v1603 = vpack.c.b16 %v1234, %v1225
    %v1604 = vpack.c.b16 %v1235, %v1226
    %v1605 = vpack.c.b16 %v1236, %v1227
    %v1606 = vpack.c.b16 %v1237, %v1228
    %v1607 = vpack.c.b16 %v1238, %v1229
    %v1608 = vpack.c.b16 %v1239, %v1230
    %v1609 = vpack.c.b16 %v1240, %v1231
    %v1610 = vpack.c.b16 %v1250, %v1241
    %v1611 = vpack.c.b16 %v1251, %v1242
    %v1612 = vpack.c.b16 %v1252, %v1243
    %v1613 = vpack.c.b16 %v1253, %v1244
    %v1614 = vpack.c.b16 %v1254, %v1245
    %v1615 = vpack.c.b16 %v1255, %v1246
    %v1616 = vpack.c.b16 %v1256, %v1247
    %v1617 = vpack.c.b16 %v1257, %v1248
    %v1618 = vpack.c.b16 %v1258, %v1249
    %v1619 = vpack.c.b16 %v1268, %v1259
    %v1620 = vpack.c.b16 %v1269, %v1260
    %v1621 = vpack.c.b16 %v1270, %v1261
    %v1622 = vpack.c.b16 %v1271, %v1262
    %v1623 = vpack.c.b16 %v1272, %v1263
    %v1624 = vpack.c.b16 %v1273, %v1264
    %v1625 = vpack.c.b16 %v1274, %v1265
    %v1626 = vpack.c.b16 %v1275, %v1266
    %v1627 = vpack.c.b16 %v1276, %v1267
    %v1628 = vpack.c.b16 %v1286, %v1277
    %v1629 = vpack.c.b16 %v1287, %v1278
    %v1630 = vpack.c.b16 %v1288, %v1279
    %v1631 = vpack.c.b16 %v1289, %v1280
    %v1632 = vpack.c.b16 %v1290, %v1281
    %v1633 = vpack.c.b16 %v1291, %v1282
    %v1634 = vpack.c.b16 %v1292, %v1283
    %v1635 = vpack.c.b16 %v1293, %v1284
    %v1636 = vpack.c.b16 %v1294, %v1285
    %v1637 = vpack.c.b16 %v1304, %v1295
    %v1638 = vpack.c.b16 %v1305, %v1296
    %v1639 = vpack.c.b16 %v1306, %v1297
    %v1640 = vpack.c.b16 %v1307, %v1298
    %v1641 = vpack.c.b16 %v1308, %v1299
    %v1642 = vpack.c.b16 %v1309, %v1300
    %v1643 = vpack.c.b16 %v1310, %v1301
    %v1644 = vpack.c.b16 %v1311, %v1302
    %v1645 = vpack.c.b16 %v1312, %v1303
    %v1646 = vpack.c.b16 %v1322, %v1313
    %v1647 = vpack.c.b16 %v1323, %v1314
    %v1648 = vpack.c.b16 %v1324, %v1315
    %v1649 = vpack.c.b16 %v1325, %v1316
    %v1650 = vpack.c.b16 %v1326, %v1317
    %v1651 = vpack.c.b16 %v1327, %v1318
    %v1652 = vpack.c.b16 %v1328, %v1319
    %v1653 = vpack.c.b16 %v1329, %v1320
    %v1654 = vpack.c.b16 %v1330, %v1321
    %v1655 = vpack.c.b16 %v1340, %v1331
    %v1656 = vpack.c.b16 %v1341, %v1332
    %v1657 = vpack.c.b16 %v1342, %v1333
    %v1658 = vpack.c.b16 %v1343, %v1334
    %v1659 = vpack.c.b16 %v1344, %v1335
    %v1660 = vpack.c.b16 %v1345, %v1336
    %v1661 = vpack.c.b16 %v1346, %v1337
    %v1662 = vpack.c.b16 %v1347, %v1338
    %v1663 = vpack.c.b16 %v1348, %v1339
    %v1664 = vpack.c.b16 %v1358, %v1349
    %v1665 = vpack.c.b16 %v1359, %v1350
    %v1666 = vpack.c.b16 %v1360, %v1351
    %v1667 = vpack.c.b16 %v1361, %v1352
    %v1668 = vpack.c.b16 %v1362, %v1353
    %v1669 = vpack.c.b16 %v1363, %v1354
    %v1670 = vpack.c.b16 %v1364, %v1355
    %v1671 = vpack.c.b16 %v1365, %v1356
    %v1672 = vpack.c.b16 %v1366, %v1357
    %v1673 = vpack.c.b16 %v1376, %v1367
    %v1674 = vpack.c.b16 %v1377, %v1368
    %v1675 = vpack.c.b16 %v1378, %v1369
    %v1676 = vpack.c.b16 %v1379, %v1370
    %v1677 = vpack.c.b16 %v1380, %v1371
    %v1678 = vpack.c.b16 %v1381, %v1372
    %v1679 = vpack.c.b16 %v1382, %v1373
    %v1680 = vpack.c.b16 %v1383, %v1374
    %v1681 = vpack.c.b16 %v1384, %v1375
    %v1682 = vpack.c.b16 %v1394, %v1385
    %v1683 = vpack.c.b16 %v1395, %v1386
    %v1684 = vpack.c.b16 %v1396, %v1387
    %v1685 = vpack.c.b16 %v1397, %v1388
    %v1686 = vpack.c.b16 %v1398, %v1389
    %v1687 = vpack.c.b16 %v1399, %v1390
    %v1688 = vpack.c.b16 %v1400, %v1391
    %v1689 = vpack.c.b16 %v1401, %v1392
    %v1690 = vpack.c.b16 %v1402, %v1393
    %1979 = vmatprep.subr.bf16.mxu0 %v1404
    %1980 = vmatpush1.bf16.msra.mxu0 %v1403
    %1981 = vmatprep.subr.bf16.mxu0 %v1413
    %1982 = vmatpush1.bf16.msra.mxu0 %v1412
    %1983 = vmatprep.subr.bf16.mxu0 %v1422
    %1984 = vmatpush1.bf16.msra.mxu0 %v1421
    %1985 = vmatprep.subr.bf16.mxu0 %v1431
    %1986 = vmatpush1.bf16.msra.mxu0 %v1430
    %1987 = vmatprep.subr.bf16.mxu0 %v1440
    %1988 = vmatpush1.bf16.msra.mxu0 %v1439
    %1989 = vmatprep.subr.bf16.mxu0 %v1449
    %1990 = vmatpush1.bf16.msra.mxu0 %v1448
    %1991 = vmatprep.subr.bf16.mxu0 %v1458
    %1992 = vmatpush1.bf16.msra.mxu0 %v1457
    %1993 = vmatprep.subr.bf16.mxu0 %v1467
    %1994 = vmatpush1.bf16.msra.mxu0 %v1466
    %1995 = vmatprep.subr.bf16.mxu0 %v1476
    %1996 = vmatpush1.bf16.msra.mxu0 %v1475
    %1997 = vmatprep.subr.bf16.mxu0 %v1485
    %1998 = vmatpush1.bf16.msra.mxu0 %v1484
    %1999 = vmatprep.subr.bf16.mxu0 %v1494
    %2000 = vmatpush1.bf16.msra.mxu0 %v1493
    %2001 = vmatprep.subr.bf16.mxu0 %v1503
    %2002 = vmatpush1.bf16.msra.mxu0 %v1502
    %2003 = vmatprep.subr.bf16.mxu0 %v1512
    %2004 = vmatpush1.bf16.msra.mxu0 %v1511
    %2005 = vmatprep.subr.bf16.mxu0 %v1521
    %2006 = vmatpush1.bf16.msra.mxu0 %v1520
    %2007 = vmatprep.subr.bf16.mxu0 %v1530
    %2008 = vmatpush1.bf16.msra.mxu0 %v1529
    %2009 = vmatprep.subr.bf16.mxu0 %v1539
    %2010 = vmatpush1.bf16.msra.mxu0 %v1538
    %2011 = vmatprep.mubr.bf16.mxu0 %v500
    %2012 = vmatmul.mubr.bf16.gmra.mrb[0].mxu0 %v499
    %v2013 = vpop.f32.mrb[0].mxu0
    %v2014 = vadd.f32 0.0, %v2013
    %v2015 = vpop.f32.mrb[0].mxu0
    %v2016 = vadd.f32 0.0, %v2015
    %v2017 = vpop.f32.mrb[0].mxu0
    %v2018 = vpop.f32.mrb[0].mxu0
    %2019 = vdwg.mxu0
    %2020 = vmatprep.subr.bf16.mxu0 %v1548
    %2021 = vmatpush1.bf16.msra.mxu0 %v1547
    %2022 = vmatprep.subr.bf16.mxu0 %v1557
    %2023 = vmatpush1.bf16.msra.mxu0 %v1556
    %2024 = vmatprep.subr.bf16.mxu0 %v1566
    %2025 = vmatpush1.bf16.msra.mxu0 %v1565
    %2026 = vmatprep.subr.bf16.mxu0 %v1575
    %2027 = vmatpush1.bf16.msra.mxu0 %v1574
    %2028 = vmatprep.subr.bf16.mxu0 %v1584
    %2029 = vmatpush1.bf16.msra.mxu0 %v1583
    %2030 = vmatprep.subr.bf16.mxu0 %v1593
    %2031 = vmatpush1.bf16.msra.mxu0 %v1592
    %2032 = vmatprep.subr.bf16.mxu0 %v1602
    %2033 = vmatpush1.bf16.msra.mxu0 %v1601
    %2034 = vmatprep.subr.bf16.mxu0 %v1611
    %2035 = vmatpush1.bf16.msra.mxu0 %v1610
    %2036 = vmatprep.subr.bf16.mxu0 %v1620
    %2037 = vmatpush1.bf16.msra.mxu0 %v1619
    %2038 = vmatprep.subr.bf16.mxu0 %v1629
    %2039 = vmatpush1.bf16.msra.mxu0 %v1628
    %2040 = vmatprep.subr.bf16.mxu0 %v1638
    %2041 = vmatpush1.bf16.msra.mxu0 %v1637
    %2042 = vmatprep.subr.bf16.mxu0 %v1647
    %2043 = vmatpush1.bf16.msra.mxu0 %v1646
    %2044 = vmatprep.subr.bf16.mxu0 %v1656
    %2045 = vmatpush1.bf16.msra.mxu0 %v1655
    %2046 = vmatprep.subr.bf16.mxu0 %v1665
    %2047 = vmatpush1.bf16.msra.mxu0 %v1664
    %2048 = vmatprep.subr.bf16.mxu0 %v1674
    %2049 = vmatpush1.bf16.msra.mxu0 %v1673
    %2050 = vmatprep.subr.bf16.mxu0 %v1683
    %2051 = vmatpush1.bf16.msra.mxu0 %v1682
    %2052 = vmatprep.mubr.bf16.mxu0 %v502
    %2053 = vmatmul.mubr.bf16.gmra.mrb[0].mxu0 %v501
    %v2054 = vpop.f32.mrb[0].mxu0
    %v2055 = vadd.f32 %v2014, %v2054
    %v2056 = vpop.f32.mrb[0].mxu0
    %v2057 = vadd.f32 %v2016, %v2056
    %v2058 = vpop.f32.mrb[0].mxu0
    %v2059 = vpop.f32.mrb[0].mxu0
    %2060 = vdwg.mxu0
    %2061 = vmatprep.subr.bf16.mxu0 %v1406
    %2062 = vmatpush1.bf16.msra.mxu0 %v1405
    %2063 = vmatprep.subr.bf16.mxu0 %v1415
    %2064 = vmatpush1.bf16.msra.mxu0 %v1414
    %2065 = vmatprep.subr.bf16.mxu0 %v1424
    %2066 = vmatpush1.bf16.msra.mxu0 %v1423
    %2067 = vmatprep.subr.bf16.mxu0 %v1433
    %2068 = vmatpush1.bf16.msra.mxu0 %v1432
    %2069 = vmatprep.subr.bf16.mxu0 %v1442
    %2070 = vmatpush1.bf16.msra.mxu0 %v1441
    %2071 = vmatprep.subr.bf16.mxu0 %v1451
    %2072 = vmatpush1.bf16.msra.mxu0 %v1450
    %2073 = vmatprep.subr.bf16.mxu0 %v1460
    %2074 = vmatpush1.bf16.msra.mxu0 %v1459
    %2075 = vmatprep.subr.bf16.mxu0 %v1469
    %2076 = vmatpush1.bf16.msra.mxu0 %v1468
    %2077 = vmatprep.subr.bf16.mxu0 %v1478
    %2078 = vmatpush1.bf16.msra.mxu0 %v1477
    %2079 = vmatprep.subr.bf16.mxu0 %v1487
    %2080 = vmatpush1.bf16.msra.mxu0 %v1486
    %2081 = vmatprep.subr.bf16.mxu0 %v1496
    %2082 = vmatpush1.bf16.msra.mxu0 %v1495
    %2083 = vmatprep.subr.bf16.mxu0 %v1505
    %2084 = vmatpush1.bf16.msra.mxu0 %v1504
    %2085 = vmatprep.subr.bf16.mxu0 %v1514
    %2086 = vmatpush1.bf16.msra.mxu0 %v1513
    %2087 = vmatprep.subr.bf16.mxu0 %v1523
    %2088 = vmatpush1.bf16.msra.mxu0 %v1522
    %2089 = vmatprep.subr.bf16.mxu0 %v1532
    %2090 = vmatpush1.bf16.msra.mxu0 %v1531
    %2091 = vmatprep.subr.bf16.mxu0 %v1541
    %2092 = vmatpush1.bf16.msra.mxu0 %v1540
    %2093 = vmatprep.mubr.bf16.mxu0 %v500
    %2094 = vmatmul.mubr.bf16.gmra.mrb[0].mxu0 %v499
    %v2095 = vpop.f32.mrb[0].mxu0
    %v2096 = vadd.f32 0.0, %v2095
    %v2097 = vpop.f32.mrb[0].mxu0
    %v2098 = vadd.f32 0.0, %v2097
    %v2099 = vpop.f32.mrb[0].mxu0
    %v2100 = vpop.f32.mrb[0].mxu0
    %2101 = vdwg.mxu0
    %2102 = vmatprep.subr.bf16.mxu0 %v1550
    %2103 = vmatpush1.bf16.msra.mxu0 %v1549
    %2104 = vmatprep.subr.bf16.mxu0 %v1559
    %2105 = vmatpush1.bf16.msra.mxu0 %v1558
    %2106 = vmatprep.subr.bf16.mxu0 %v1568
    %2107 = vmatpush1.bf16.msra.mxu0 %v1567
    %2108 = vmatprep.subr.bf16.mxu0 %v1577
    %2109 = vmatpush1.bf16.msra.mxu0 %v1576
    %2110 = vmatprep.subr.bf16.mxu0 %v1586
    %2111 = vmatpush1.bf16.msra.mxu0 %v1585
    %2112 = vmatprep.subr.bf16.mxu0 %v1595
    %2113 = vmatpush1.bf16.msra.mxu0 %v1594
    %2114 = vmatprep.subr.bf16.mxu0 %v1604
    %2115 = vmatpush1.bf16.msra.mxu0 %v1603
    %2116 = vmatprep.subr.bf16.mxu0 %v1613
    %2117 = vmatpush1.bf16.msra.mxu0 %v1612
    %2118 = vmatprep.subr.bf16.mxu0 %v1622
    %2119 = vmatpush1.bf16.msra.mxu0 %v1621
    %2120 = vmatprep.subr.bf16.mxu0 %v1631
    %2121 = vmatpush1.bf16.msra.mxu0 %v1630
    %2122 = vmatprep.subr.bf16.mxu0 %v1640
    %2123 = vmatpush1.bf16.msra.mxu0 %v1639
    %2124 = vmatprep.subr.bf16.mxu0 %v1649
    %2125 = vmatpush1.bf16.msra.mxu0 %v1648
    %2126 = vmatprep.subr.bf16.mxu0 %v1658
    %2127 = vmatpush1.bf16.msra.mxu0 %v1657
    %2128 = vmatprep.subr.bf16.mxu0 %v1667
    %2129 = vmatpush1.bf16.msra.mxu0 %v1666
    %2130 = vmatprep.subr.bf16.mxu0 %v1676
    %2131 = vmatpush1.bf16.msra.mxu0 %v1675
    %2132 = vmatprep.subr.bf16.mxu0 %v1685
    %2133 = vmatpush1.bf16.msra.mxu0 %v1684
    %2134 = vmatprep.mubr.bf16.mxu0 %v502
    %2135 = vmatmul.mubr.bf16.gmra.mrb[0].mxu0 %v501
    %v2136 = vpop.f32.mrb[0].mxu0
    %v2137 = vadd.f32 %v2096, %v2136
    %v2138 = vpop.f32.mrb[0].mxu0
    %v2139 = vadd.f32 %v2098, %v2138
    %v2140 = vpop.f32.mrb[0].mxu0
    %v2141 = vpop.f32.mrb[0].mxu0
    %2142 = vdwg.mxu0
    %2143 = vmatprep.subr.bf16.mxu0 %v1408
    %2144 = vmatpush1.bf16.msra.mxu0 %v1407
    %2145 = vmatprep.subr.bf16.mxu0 %v1417
    %2146 = vmatpush1.bf16.msra.mxu0 %v1416
    %2147 = vmatprep.subr.bf16.mxu0 %v1426
    %2148 = vmatpush1.bf16.msra.mxu0 %v1425
    %2149 = vmatprep.subr.bf16.mxu0 %v1435
    %2150 = vmatpush1.bf16.msra.mxu0 %v1434
    %2151 = vmatprep.subr.bf16.mxu0 %v1444
    %2152 = vmatpush1.bf16.msra.mxu0 %v1443
    %2153 = vmatprep.subr.bf16.mxu0 %v1453
    %2154 = vmatpush1.bf16.msra.mxu0 %v1452
    %2155 = vmatprep.subr.bf16.mxu0 %v1462
    %2156 = vmatpush1.bf16.msra.mxu0 %v1461
    %2157 = vmatprep.subr.bf16.mxu0 %v1471
    %2158 = vmatpush1.bf16.msra.mxu0 %v1470
    %2159 = vmatprep.subr.bf16.mxu0 %v1480
    %2160 = vmatpush1.bf16.msra.mxu0 %v1479
    %2161 = vmatprep.subr.bf16.mxu0 %v1489
    %2162 = vmatpush1.bf16.msra.mxu0 %v1488
    %2163 = vmatprep.subr.bf16.mxu0 %v1498
    %2164 = vmatpush1.bf16.msra.mxu0 %v1497
    %2165 = vmatprep.subr.bf16.mxu0 %v1507
    %2166 = vmatpush1.bf16.msra.mxu0 %v1506
    %2167 = vmatprep.subr.bf16.mxu0 %v1516
    %2168 = vmatpush1.bf16.msra.mxu0 %v1515
    %2169 = vmatprep.subr.bf16.mxu0 %v1525
    %2170 = vmatpush1.bf16.msra.mxu0 %v1524
    %2171 = vmatprep.subr.bf16.mxu0 %v1534
    %2172 = vmatpush1.bf16.msra.mxu0 %v1533
    %2173 = vmatprep.subr.bf16.mxu0 %v1543
    %2174 = vmatpush1.bf16.msra.mxu0 %v1542
    %2175 = vmatprep.mubr.bf16.mxu0 %v500
    %2176 = vmatmul.mubr.bf16.gmra.mrb[0].mxu0 %v499
    %v2177 = vpop.f32.mrb[0].mxu0
    %v2178 = vadd.f32 0.0, %v2177
    %v2179 = vpop.f32.mrb[0].mxu0
    %v2180 = vadd.f32 0.0, %v2179
    %v2181 = vpop.f32.mrb[0].mxu0
    %v2182 = vpop.f32.mrb[0].mxu0
    %2183 = vdwg.mxu0
    %2184 = vmatprep.subr.bf16.mxu0 %v1552
    %2185 = vmatpush1.bf16.msra.mxu0 %v1551
    %2186 = vmatprep.subr.bf16.mxu0 %v1561
    %2187 = vmatpush1.bf16.msra.mxu0 %v1560
    %2188 = vmatprep.subr.bf16.mxu0 %v1570
    %2189 = vmatpush1.bf16.msra.mxu0 %v1569
    %2190 = vmatprep.subr.bf16.mxu0 %v1579
    %2191 = vmatpush1.bf16.msra.mxu0 %v1578
    %2192 = vmatprep.subr.bf16.mxu0 %v1588
    %2193 = vmatpush1.bf16.msra.mxu0 %v1587
    %2194 = vmatprep.subr.bf16.mxu0 %v1597
    %2195 = vmatpush1.bf16.msra.mxu0 %v1596
    %2196 = vmatprep.subr.bf16.mxu0 %v1606
    %2197 = vmatpush1.bf16.msra.mxu0 %v1605
    %2198 = vmatprep.subr.bf16.mxu0 %v1615
    %2199 = vmatpush1.bf16.msra.mxu0 %v1614
    %2200 = vmatprep.subr.bf16.mxu0 %v1624
    %2201 = vmatpush1.bf16.msra.mxu0 %v1623
    %2202 = vmatprep.subr.bf16.mxu0 %v1633
    %2203 = vmatpush1.bf16.msra.mxu0 %v1632
    %2204 = vmatprep.subr.bf16.mxu0 %v1642
    %2205 = vmatpush1.bf16.msra.mxu0 %v1641
    %2206 = vmatprep.subr.bf16.mxu0 %v1651
    %2207 = vmatpush1.bf16.msra.mxu0 %v1650
    %2208 = vmatprep.subr.bf16.mxu0 %v1660
    %2209 = vmatpush1.bf16.msra.mxu0 %v1659
    %2210 = vmatprep.subr.bf16.mxu0 %v1669
    %2211 = vmatpush1.bf16.msra.mxu0 %v1668
    %2212 = vmatprep.subr.bf16.mxu0 %v1678
    %2213 = vmatpush1.bf16.msra.mxu0 %v1677
    %2214 = vmatprep.subr.bf16.mxu0 %v1687
    %2215 = vmatpush1.bf16.msra.mxu0 %v1686
    %2216 = vmatprep.mubr.bf16.mxu0 %v502
    %2217 = vmatmul.mubr.bf16.gmra.mrb[0].mxu0 %v501
    %v2218 = vpop.f32.mrb[0].mxu0
    %v2219 = vadd.f32 %v2178, %v2218
    %v2220 = vpop.f32.mrb[0].mxu0
    %v2221 = vadd.f32 %v2180, %v2220
    %v2222 = vpop.f32.mrb[0].mxu0
    %v2223 = vpop.f32.mrb[0].mxu0
    %2224 = vdwg.mxu0
    %2225 = vmatprep.subr.bf16.mxu0 %v1410
    %2226 = vmatpush1.bf16.msra.mxu0 %v1409
    %2227 = vmatprep.subr.bf16.mxu0 %v1419
    %2228 = vmatpush1.bf16.msra.mxu0 %v1418
    %2229 = vmatprep.subr.bf16.mxu0 %v1428
    %2230 = vmatpush1.bf16.msra.mxu0 %v1427
    %2231 = vmatprep.subr.bf16.mxu0 %v1437
    %2232 = vmatpush1.bf16.msra.mxu0 %v1436
    %2233 = vmatprep.subr.bf16.mxu0 %v1446
    %2234 = vmatpush1.bf16.msra.mxu0 %v1445
    %2235 = vmatprep.subr.bf16.mxu0 %v1455
    %2236 = vmatpush1.bf16.msra.mxu0 %v1454
    %2237 = vmatprep.subr.bf16.mxu0 %v1464
    %2238 = vmatpush1.bf16.msra.mxu0 %v1463
    %2239 = vmatprep.subr.bf16.mxu0 %v1473
    %2240 = vmatpush1.bf16.msra.mxu0 %v1472
    %2241 = vmatprep.subr.bf16.mxu0 %v1482
    %2242 = vmatpush1.bf16.msra.mxu0 %v1481
    %2243 = vmatprep.subr.bf16.mxu0 %v1491
    %2244 = vmatpush1.bf16.msra.mxu0 %v1490
    %2245 = vmatprep.subr.bf16.mxu0 %v1500
    %2246 = vmatpush1.bf16.msra.mxu0 %v1499
    %2247 = vmatprep.subr.bf16.mxu0 %v1509
    %2248 = vmatpush1.bf16.msra.mxu0 %v1508
    %2249 = vmatprep.subr.bf16.mxu0 %v1518
    %2250 = vmatpush1.bf16.msra.mxu0 %v1517
    %2251 = vmatprep.subr.bf16.mxu0 %v1527
    %2252 = vmatpush1.bf16.msra.mxu0 %v1526
    %2253 = vmatprep.subr.bf16.mxu0 %v1536
    %2254 = vmatpush1.bf16.msra.mxu0 %v1535
    %2255 = vmatprep.subr.bf16.mxu0 %v1545
    %2256 = vmatpush1.bf16.msra.mxu0 %v1544
    %2257 = vmatprep.mubr.bf16.mxu0 %v500
    %2258 = vmatmul.mubr.bf16.gmra.mrb[0].mxu0 %v499
    %v2259 = vpop.f32.mrb[0].mxu0
    %v2260 = vadd.f32 0.0, %v2259
    %v2261 = vpop.f32.mrb[0].mxu0
    %v2262 = vadd.f32 0.0, %v2261
    %v2263 = vpop.f32.mrb[0].mxu0
    %v2264 = vpop.f32.mrb[0].mxu0
    %2265 = vdwg.mxu0
    %2266 = vmatprep.subr.bf16.mxu0 %v1554
    %2267 = vmatpush1.bf16.msra.mxu0 %v1553
    %2268 = vmatprep.subr.bf16.mxu0 %v1563
    %2269 = vmatpush1.bf16.msra.mxu0 %v1562
    %2270 = vmatprep.subr.bf16.mxu0 %v1572
    %2271 = vmatpush1.bf16.msra.mxu0 %v1571
    %2272 = vmatprep.subr.bf16.mxu0 %v1581
    %2273 = vmatpush1.bf16.msra.mxu0 %v1580
    %2274 = vmatprep.subr.bf16.mxu0 %v1590
    %2275 = vmatpush1.bf16.msra.mxu0 %v1589
    %2276 = vmatprep.subr.bf16.mxu0 %v1599
    %2277 = vmatpush1.bf16.msra.mxu0 %v1598
    %2278 = vmatprep.subr.bf16.mxu0 %v1608
    %2279 = vmatpush1.bf16.msra.mxu0 %v1607
    %2280 = vmatprep.subr.bf16.mxu0 %v1617
    %2281 = vmatpush1.bf16.msra.mxu0 %v1616
    %2282 = vmatprep.subr.bf16.mxu0 %v1626
    %2283 = vmatpush1.bf16.msra.mxu0 %v1625
    %2284 = vmatprep.subr.bf16.mxu0 %v1635
    %2285 = vmatpush1.bf16.msra.mxu0 %v1634
    %2286 = vmatprep.subr.bf16.mxu0 %v1644
    %2287 = vmatpush1.bf16.msra.mxu0 %v1643
    %2288 = vmatprep.subr.bf16.mxu0 %v1653
    %2289 = vmatpush1.bf16.msra.mxu0 %v1652
    %2290 = vmatprep.subr.bf16.mxu0 %v1662
    %2291 = vmatpush1.bf16.msra.mxu0 %v1661
    %2292 = vmatprep.subr.bf16.mxu0 %v1671
    %2293 = vmatpush1.bf16.msra.mxu0 %v1670
    %2294 = vmatprep.subr.bf16.mxu0 %v1680
    %2295 = vmatpush1.bf16.msra.mxu0 %v1679
    %2296 = vmatprep.subr.bf16.mxu0 %v1689
    %2297 = vmatpush1.bf16.msra.mxu0 %v1688
    %2298 = vmatprep.mubr.bf16.mxu0 %v502
    %2299 = vmatmul.mubr.bf16.gmra.mrb[0].mxu0 %v501
    %v2300 = vpop.f32.mrb[0].mxu0
    %v2301 = vadd.f32 %v2260, %v2300
    %v2302 = vpop.f32.mrb[0].mxu0
    %v2303 = vadd.f32 %v2262, %v2302
    %v2304 = vpop.f32.mrb[0].mxu0
    %v2305 = vpop.f32.mrb[0].mxu0
    %2306 = vdwg.mxu0
    %2307 = vmatprep.subr.bf16.mxu0 0
    %2308 = vmatpush1.bf16.msra.mxu0 %v1411
    %2309 = vmatprep.subr.bf16.mxu0 0
    %2310 = vmatpush1.bf16.msra.mxu0 %v1420
    %2311 = vmatprep.subr.bf16.mxu0 0
    %2312 = vmatpush1.bf16.msra.mxu0 %v1429
    %2313 = vmatprep.subr.bf16.mxu0 0
    %2314 = vmatpush1.bf16.msra.mxu0 %v1438
    %2315 = vmatprep.subr.bf16.mxu0 0
    %2316 = vmatpush1.bf16.msra.mxu0 %v1447
    %2317 = vmatprep.subr.bf16.mxu0 0
    %2318 = vmatpush1.bf16.msra.mxu0 %v1456
    %2319 = vmatprep.subr.bf16.mxu0 0
    %2320 = vmatpush1.bf16.msra.mxu0 %v1465
    %2321 = vmatprep.subr.bf16.mxu0 0
    %2322 = vmatpush1.bf16.msra.mxu0 %v1474
    %2323 = vmatprep.subr.bf16.mxu0 0
    %2324 = vmatpush1.bf16.msra.mxu0 %v1483
    %2325 = vmatprep.subr.bf16.mxu0 0
    %2326 = vmatpush1.bf16.msra.mxu0 %v1492
    %2327 = vmatprep.subr.bf16.mxu0 0
    %2328 = vmatpush1.bf16.msra.mxu0 %v1501
    %2329 = vmatprep.subr.bf16.mxu0 0
    %2330 = vmatpush1.bf16.msra.mxu0 %v1510
    %2331 = vmatprep.subr.bf16.mxu0 0
    %2332 = vmatpush1.bf16.msra.mxu0 %v1519
    %2333 = vmatprep.subr.bf16.mxu0 0
    %2334 = vmatpush1.bf16.msra.mxu0 %v1528
    %2335 = vmatprep.subr.bf16.mxu0 0
    %2336 = vmatpush1.bf16.msra.mxu0 %v1537
    %2337 = vmatprep.subr.bf16.mxu0 0
    %2338 = vmatpush1.bf16.msra.mxu0 %v1546
    %2339 = vmatprep.mubr.bf16.mxu0 %v500
    %2340 = vmatmul.mubr.bf16.gmra.mrb[0].mxu0 %v499
    %v2341 = vpop.f32.mrb[0].mxu0
    %v2342 = vadd.f32 0.0, %v2341
    %v2343 = vpop.f32.mrb[0].mxu0
    %v2344 = vpop.f32.mrb[0].mxu0
    %v2345 = vpop.f32.mrb[0].mxu0
    %2346 = vdwg.mxu0
    %2347 = vmatprep.subr.bf16.mxu0 0
    %2348 = vmatpush1.bf16.msra.mxu0 %v1555
    %2349 = vmatprep.subr.bf16.mxu0 0
    %2350 = vmatpush1.bf16.msra.mxu0 %v1564
    %2351 = vmatprep.subr.bf16.mxu0 0
    %2352 = vmatpush1.bf16.msra.mxu0 %v1573
    %2353 = vmatprep.subr.bf16.mxu0 0
    %2354 = vmatpush1.bf16.msra.mxu0 %v1582
    %2355 = vmatprep.subr.bf16.mxu0 0
    %2356 = vmatpush1.bf16.msra.mxu0 %v1591
    %2357 = vmatprep.subr.bf16.mxu0 0
    %2358 = vmatpush1.bf16.msra.mxu0 %v1600
    %2359 = vmatprep.subr.bf16.mxu0 0
    %2360 = vmatpush1.bf16.msra.mxu0 %v1609
    %2361 = vmatprep.subr.bf16.mxu0 0
    %2362 = vmatpush1.bf16.msra.mxu0 %v1618
    %2363 = vmatprep.subr.bf16.mxu0 0
    %2364 = vmatpush1.bf16.msra.mxu0 %v1627
    %2365 = vmatprep.subr.bf16.mxu0 0
    %2366 = vmatpush1.bf16.msra.mxu0 %v1636
    %2367 = vmatprep.subr.bf16.mxu0 0
    %2368 = vmatpush1.bf16.msra.mxu0 %v1645
    %2369 = vmatprep.subr.bf16.mxu0 0
    %2370 = vmatpush1.bf16.msra.mxu0 %v1654
    %2371 = vmatprep.subr.bf16.mxu0 0
    %2372 = vmatpush1.bf16.msra.mxu0 %v1663
    %2373 = vmatprep.subr.bf16.mxu0 0
    %2374 = vmatpush1.bf16.msra.mxu0 %v1672
    %2375 = vmatprep.subr.bf16.mxu0 0
    %2376 = vmatpush1.bf16.msra.mxu0 %v1681
    %2377 = vmatprep.subr.bf16.mxu0 0
    %2378 = vmatpush1.bf16.msra.mxu0 %v1690
    %2379 = vmatprep.mubr.bf16.mxu0 %v502
    %2380 = vmatmul.mubr.bf16.gmra.mrb[0].mxu0 %v501
    %v2381 = vpop.f32.mrb[0].mxu0
    %v2382 = vadd.f32 %v2342, %v2381
    %v2383 = vpop.f32.mrb[0].mxu0
    %v2384 = vpop.f32.mrb[0].mxu0
    %v2385 = vpop.f32.mrb[0].mxu0
    %2386 = vdwg.mxu0
    %v2396 = vcombine.low %v2055, %v2057
    %v2397 = vcombine.low %v2137, %v2139
    %v2399 = vunpack.c.l.s4 1983009808
    %v2400 = vunpack.c.0.s8 %v2399
    %v2401 = vlaneseq
    %v2402 = vshrl.u32 %v2401, 7
    %v2403 = vsub.s32 %v2400, %v2402
    %v2404 = vrot.slane %v2396, %v2403
    %v2406 = vunpack.c.l.s4 1983009808
    %v2407 = vunpack.c.0.s8 %v2406
    %v2408 = vlaneseq
    %v2409 = vshrl.u32 %v2408, 7
    %v2410 = vsub.s32 %v2407, %v2409
    %v2411 = vrot.slane %v2397, %v2410
    %v2412 = vcombine.low %v2404, %v2411
    %v2413 = vcombine.low %v2219, %v2221
    %v2414 = vcombine.low %v2301, %v2303
    %v2416 = vunpack.c.l.s4 1983009808
    %v2417 = vunpack.c.0.s8 %v2416
    %v2418 = vlaneseq
    %v2419 = vshrl.u32 %v2418, 7
    %v2420 = vsub.s32 %v2417, %v2419
    %v2421 = vrot.slane %v2413, %v2420
    %v2423 = vunpack.c.l.s4 1983009808
    %v2424 = vunpack.c.0.s8 %v2423
    %v2425 = vlaneseq
    %v2426 = vshrl.u32 %v2425, 7
    %v2427 = vsub.s32 %v2424, %v2426
    %v2428 = vrot.slane %v2414, %v2427
    %v2429 = vcombine.low %v2421, %v2428
    %v2431 = vunpack.c.l.s4 1983009808
    %v2432 = vunpack.c.0.s8 %v2431
    %v2433 = vlaneseq
    %v2434 = vshrl.u32 %v2433, 7
    %v2435 = vsub.s32 %v2432, %v2434
    %v2436 = vrot.slane %v2382, %v2435
    %2440 = vst [vmem:[#allocation7] sm:$0xff] %v2412
    %2441 = vst [vmem:[#allocation7 + $0x8] sm:$0xff] %v2429
    %2442 = vst [vmem:[#allocation7 + $0x10] sm:$0x3] %v2436
    // Predicated region
    $region18: #{tpu_custom_call.1} parent=1 // pred_check
      _
    $region19: #{tpu_custom_call.1} parent=1 // pred_check_branch
      %2444 = sbr.rel (0) target = $region21
    $region20: #{tpu_custom_call.1} parent=1 // pred_region
      %s2446 = ssub.s32 288, 288
      %2447 = vsyncadd [#allocation4], %s2446
      %s2449 = sshll.u32 [#allocation7], 4
      %s2450 = int_to_ptr.vmem [resolvable:$true] %s2449
      %2452 = dma.vmem_to_hbm [thread:$0]  %s2450, 288, %s2, [#allocation4]
    $region21: #{tpu_custom_call.1} parent=1 // pred_fallthru
      _
    // Predicated region
    $region22: #{tpu_custom_call.1} parent=1 // pred_check
      _
    $region23: #{tpu_custom_call.1} parent=1 // pred_check_branch
      %2454 = sbr.rel (0) target = $region25
    $region24: #{tpu_custom_call.1} parent=1 // pred_region
      %2455 = dma.done [#allocation4], 288
    $region25: #{tpu_custom_call.1} parent=1 // pred_fallthru
      _
    %2456 = vsyncpa [#allocation3], 1
    %2457 = vsyncpa [#allocation6], 1
    %2458 = vsyncpa [#allocation4], 1

</llo_original>
